<compile_context>
chip_gen: v5e
topology: v5e:2x2
jax: 0.10.0
libtpu: 0.0.40
codegen_flags: <defaults>
</compile_context>

<pallas_src>
import jax
import jax.numpy as jnp
from jax.experimental import pallas as pl
from jax.experimental.pallas import tpu as pltpu

INPUT = 2
HIDDEN = 16
OUT = 2
GATES = 4 * HIDDEN  # 64

# Row offsets inside the packed f32 parameter slab (all multiples of 8 so
# every in-kernel slice is a sublane-aligned window).
R_WIH = 0    # (INPUT, GATES)   W_ih^T
R_WHH = 8    # (HIDDEN, GATES)  W_hh^T
R_B = 24     # (1, GATES)       b_ih + b_hh
R_W1 = 32    # (HIDDEN, HIDDEN) fc1 weight^T in cols [0, HIDDEN)
R_B1 = 48    # (1, HIDDEN)      fc1 bias     in cols [0, HIDDEN)
R_W2 = 56    # (HIDDEN, OUT)    fc2 weight^T in cols [0, OUT)
R_B2 = 72    # (1, OUT)         fc2 bias     in cols [0, OUT)
SLAB_ROWS = 80


def policy_kernel(x_ref, p_ref, out_ref):
    # x_ref:   (B_pad, T*INPUT)     f32, batch-first flat (col = t*INPUT + k)
    # p_ref:   (SLAB_ROWS, GATES)   f32 packed parameter slab (layout above)
    # out_ref: (B_pad, OUT)         f32 softmax probabilities
    H = HIDDEN
    Bp = x_ref.shape[0]
    T = x_ref.shape[1] // INPUT

    x = x_ref[...]                                    # (Bp, T*INPUT), single load

    wih = p_ref[R_WIH:R_WIH + INPUT, :]               # (INPUT, GATES)
    whh = p_ref[R_WHH:R_WHH + H, :]                   # (H, GATES)
    b = p_ref[R_B:R_B + 1, :]                         # (1, GATES)

    # Hoisted sublane broadcasts: traced once, reused by every unrolled step.
    wih_rows = [jnp.broadcast_to(wih[k:k + 1, :], (Bp, GATES)) for k in range(INPUT)]
    whh_rows = [jnp.broadcast_to(whh[k:k + 1, :], (Bp, GATES)) for k in range(H)]
    b_row = jnp.broadcast_to(b, (Bp, GATES))

    h = jnp.zeros((Bp, H), jnp.float32)
    c = jnp.zeros((Bp, H), jnp.float32)

    # Fully unrolled recurrence (T is compile-time static and small).
    # TODO(synk): switch to lax.fori_loop(..., unroll=True) if T grows / is dynamic.
    for t in range(T):
        # input projection (K=2): two VPU broadcast-FMAs, no MXU fill
        gates = b_row
        for k in range(INPUT):
            col = INPUT * t + k
            gates = gates + x[:, col:col + 1] * wih_rows[k]
        # recurrent term h @ W_hh^T: 16 VPU broadcast-FMAs on the serial chain
        # (avoids a per-step MXU weight fill on v6e/v7x; v5e may prefer MXU)
        for k in range(H):
            gates = gates + h[:, k:k + 1] * whh_rows[k]
        # gate order i, f, g, o (PyTorch)
        sig = jax.nn.sigmoid(gates)                   # full width: i, f, o used
        i_g = sig[:, 0:H]
        f_g = sig[:, H:2 * H]
        o_g = sig[:, 3 * H:4 * H]
        g_g = jnp.tanh(gates[:, 2 * H:3 * H])         # tanh only on the g slice
        c = f_g * c + i_g * g_g
        h = o_g * jnp.tanh(c)

    # fc1 + ReLU (one tiny MXU matmul, off the serial chain)
    w1 = p_ref[R_W1:R_W1 + H, 0:H]                    # (H, H)
    b1 = p_ref[R_B1:R_B1 + 1, 0:H]                    # (1, H)
    z1 = jnp.maximum(jnp.dot(h, w1, preferred_element_type=jnp.float32) + b1, 0.0)

    # fc2 + softmax(dim=-1)
    w2 = p_ref[R_W2:R_W2 + H, 0:OUT]                  # (H, OUT)
    b2 = p_ref[R_B2:R_B2 + 1, 0:OUT]                  # (1, OUT)
    logits = jnp.dot(z1, w2, preferred_element_type=jnp.float32) + b2
    m = jnp.max(logits, axis=-1, keepdims=True)
    e = jnp.exp(logits - m)
    denom = jnp.sum(e, axis=-1, keepdims=True)
    out_ref[...] = e * pl.reciprocal(denom, approx=True)


def pack_params(params):
    """One-time packing of PyTorch-shaped params into a single f32 slab.
    Transposes / bias sum / padding happen here, NOT per forward call."""
    w_ih, w_hh, b_ih, b_hh, w1, b1, w2, b2 = params
    slab = jnp.zeros((SLAB_ROWS, GATES), jnp.float32)
    slab = slab.at[R_WIH:R_WIH + INPUT, :].set(jnp.transpose(w_ih).astype(jnp.float32))
    slab = slab.at[R_WHH:R_WHH + HIDDEN, :].set(jnp.transpose(w_hh).astype(jnp.float32))
    slab = slab.at[R_B, :].set((b_ih + b_hh).astype(jnp.float32))
    slab = slab.at[R_W1:R_W1 + HIDDEN, 0:HIDDEN].set(jnp.transpose(w1).astype(jnp.float32))
    slab = slab.at[R_B1, 0:HIDDEN].set(b1.astype(jnp.float32))
    slab = slab.at[R_W2:R_W2 + HIDDEN, 0:OUT].set(jnp.transpose(w2).astype(jnp.float32))
    slab = slab.at[R_B2, 0:OUT].set(b2.astype(jnp.float32))
    return slab


@jax.jit
def policy_forward(x, slab):
    """x: (B, T, INPUT) float32 (PyTorch batch_first layout)."""
    B, T, _ = x.shape
    b_pad = max(8, -(-B // 8) * 8)                    # pad batch to the f32 sublane tile
    # batch-first flatten is a free contiguous reshape (no transpose HLO);
    # the row-pad is a few hundred bytes.
    x_flat = x.reshape(B, T * INPUT).astype(jnp.float32)
    x_pad = jnp.pad(x_flat, ((0, b_pad - B), (0, 0)))

    vmem = pl.BlockSpec(memory_space=pltpu.MemorySpace.VMEM)
    # TODO(synk): for production batch sizes add a grid over B (tiles in
    # multiples of 8); dimension_semantics=("parallel",) only pays on v7x's
    # 2 TensorCores, and the per-tile VMEM budget must be re-derived for
    # v7x's 64 MiB (32 MiB scoped default) rather than reusing a v5e/v6e tile.
    out = pl.pallas_call(
        policy_kernel,
        out_shape=jax.ShapeDtypeStruct((b_pad, OUT), jnp.float32),
        in_specs=[vmem, vmem],
        out_specs=vmem,
    )(x_pad, slab)
    return out[:B]


def init_params(key):
    """Deterministic parameter init matching PyTorch shapes."""
    ks = jax.random.split(key, 8)
    scale = 0.25  # ~ 1/sqrt(hidden_size)
    w_ih = jax.random.uniform(ks[0], (4 * HIDDEN, INPUT), jnp.float32, -scale, scale)
    w_hh = jax.random.uniform(ks[1], (4 * HIDDEN, HIDDEN), jnp.float32, -scale, scale)
    b_ih = jax.random.uniform(ks[2], (4 * HIDDEN,), jnp.float32, -scale, scale)
    b_hh = jax.random.uniform(ks[3], (4 * HIDDEN,), jnp.float32, -scale, scale)
    w1 = jax.random.uniform(ks[4], (HIDDEN, HIDDEN), jnp.float32, -scale, scale)
    b1 = jax.random.uniform(ks[5], (HIDDEN,), jnp.float32, -scale, scale)
    w2 = jax.random.uniform(ks[6], (OUT, HIDDEN), jnp.float32, -scale, scale)
    b2 = jax.random.uniform(ks[7], (OUT,), jnp.float32, -scale, scale)
    return (w_ih, w_hh, b_ih, b_hh, w1, b1, w2, b2)


if __name__ == "__main__":
    key = jax.random.PRNGKey(0)
    k_x, k_p = jax.random.split(key)
    B, T = 2, 8
    x = jax.random.normal(k_x, (B, T, INPUT), jnp.float32)
    params = init_params(k_p)
    slab = pack_params(params)

    probs = policy_forward(x, slab)
    jax.block_until_ready(probs)

    assert probs.shape == (B, OUT)
    assert bool(jnp.all(jnp.isfinite(probs)))
    assert bool(jnp.allclose(jnp.sum(probs, axis=-1), 1.0, atol=2e-3))
    print("KERNEL_OK")
</pallas_src>

<mosaic_0001>
module attributes {stable_mosaic.version = 11 : i64} {
  func.func @policy_kernel(%arg0: memref<8x16xf32, #tpu.memory_space<vmem>>, %arg1: memref<80x64xf32, #tpu.memory_space<vmem>>, %arg2: memref<8x2xf32, #tpu.memory_space<vmem>>) attributes {dimension_semantics = [], scalar_prefetch = 0 : i64, scratch_operands = 0 : i64, tpu.core_type = #tpu.core_type<tc>} {
    %c0 = arith.constant 0 : index
    %c0_0 = arith.constant 0 : index
    %0 = vector.load %arg0[%c0, %c0_0] : memref<8x16xf32, #tpu.memory_space<vmem>>, vector<8x16xf32>
    %c0_1 = arith.constant 0 : index
    %c0_2 = arith.constant 0 : index
    %1 = vector.load %arg1[%c0_1, %c0_2] : memref<80x64xf32, #tpu.memory_space<vmem>>, vector<2x64xf32>
    %c8 = arith.constant 8 : index
    %c0_3 = arith.constant 0 : index
    %2 = vector.load %arg1[%c8, %c0_3] : memref<80x64xf32, #tpu.memory_space<vmem>>, vector<16x64xf32>
    %c24 = arith.constant 24 : index
    %c0_4 = arith.constant 0 : index
    %3 = vector.load %arg1[%c24, %c0_4] : memref<80x64xf32, #tpu.memory_space<vmem>>, vector<1x64xf32>
    %4 = vector.extract_strided_slice %1 {offsets = [0, 0], sizes = [1, 64], strides = [1, 1]} : vector<2x64xf32> to vector<1x64xf32>
    %5 = vector.shape_cast %4 : vector<1x64xf32> to vector<1x64xf32>
    %6 = vector.broadcast %5 : vector<1x64xf32> to vector<8x64xf32>
    %7 = vector.extract_strided_slice %1 {offsets = [1, 0], sizes = [1, 64], strides = [1, 1]} : vector<2x64xf32> to vector<1x64xf32>
    %8 = vector.shape_cast %7 : vector<1x64xf32> to vector<1x64xf32>
    %9 = vector.broadcast %8 : vector<1x64xf32> to vector<8x64xf32>
    %10 = vector.extract_strided_slice %2 {offsets = [0, 0], sizes = [1, 64], strides = [1, 1]} : vector<16x64xf32> to vector<1x64xf32>
    %11 = vector.shape_cast %10 : vector<1x64xf32> to vector<1x64xf32>
    %12 = vector.broadcast %11 : vector<1x64xf32> to vector<8x64xf32>
    %13 = vector.extract_strided_slice %2 {offsets = [1, 0], sizes = [1, 64], strides = [1, 1]} : vector<16x64xf32> to vector<1x64xf32>
    %14 = vector.shape_cast %13 : vector<1x64xf32> to vector<1x64xf32>
    %15 = vector.broadcast %14 : vector<1x64xf32> to vector<8x64xf32>
    %16 = vector.extract_strided_slice %2 {offsets = [2, 0], sizes = [1, 64], strides = [1, 1]} : vector<16x64xf32> to vector<1x64xf32>
    %17 = vector.shape_cast %16 : vector<1x64xf32> to vector<1x64xf32>
    %18 = vector.broadcast %17 : vector<1x64xf32> to vector<8x64xf32>
    %19 = vector.extract_strided_slice %2 {offsets = [3, 0], sizes = [1, 64], strides = [1, 1]} : vector<16x64xf32> to vector<1x64xf32>
    %20 = vector.shape_cast %19 : vector<1x64xf32> to vector<1x64xf32>
    %21 = vector.broadcast %20 : vector<1x64xf32> to vector<8x64xf32>
    %22 = vector.extract_strided_slice %2 {offsets = [4, 0], sizes = [1, 64], strides = [1, 1]} : vector<16x64xf32> to vector<1x64xf32>
    %23 = vector.shape_cast %22 : vector<1x64xf32> to vector<1x64xf32>
    %24 = vector.broadcast %23 : vector<1x64xf32> to vector<8x64xf32>
    %25 = vector.extract_strided_slice %2 {offsets = [5, 0], sizes = [1, 64], strides = [1, 1]} : vector<16x64xf32> to vector<1x64xf32>
    %26 = vector.shape_cast %25 : vector<1x64xf32> to vector<1x64xf32>
    %27 = vector.broadcast %26 : vector<1x64xf32> to vector<8x64xf32>
    %28 = vector.extract_strided_slice %2 {offsets = [6, 0], sizes = [1, 64], strides = [1, 1]} : vector<16x64xf32> to vector<1x64xf32>
    %29 = vector.shape_cast %28 : vector<1x64xf32> to vector<1x64xf32>
    %30 = vector.broadcast %29 : vector<1x64xf32> to vector<8x64xf32>
    %31 = vector.extract_strided_slice %2 {offsets = [7, 0], sizes = [1, 64], strides = [1, 1]} : vector<16x64xf32> to vector<1x64xf32>
    %32 = vector.shape_cast %31 : vector<1x64xf32> to vector<1x64xf32>
    %33 = vector.broadcast %32 : vector<1x64xf32> to vector<8x64xf32>
    %34 = vector.extract_strided_slice %2 {offsets = [8, 0], sizes = [1, 64], strides = [1, 1]} : vector<16x64xf32> to vector<1x64xf32>
    %35 = vector.shape_cast %34 : vector<1x64xf32> to vector<1x64xf32>
    %36 = vector.broadcast %35 : vector<1x64xf32> to vector<8x64xf32>
    %37 = vector.extract_strided_slice %2 {offsets = [9, 0], sizes = [1, 64], strides = [1, 1]} : vector<16x64xf32> to vector<1x64xf32>
    %38 = vector.shape_cast %37 : vector<1x64xf32> to vector<1x64xf32>
    %39 = vector.broadcast %38 : vector<1x64xf32> to vector<8x64xf32>
    %40 = vector.extract_strided_slice %2 {offsets = [10, 0], sizes = [1, 64], strides = [1, 1]} : vector<16x64xf32> to vector<1x64xf32>
    %41 = vector.shape_cast %40 : vector<1x64xf32> to vector<1x64xf32>
    %42 = vector.broadcast %41 : vector<1x64xf32> to vector<8x64xf32>
    %43 = vector.extract_strided_slice %2 {offsets = [11, 0], sizes = [1, 64], strides = [1, 1]} : vector<16x64xf32> to vector<1x64xf32>
    %44 = vector.shape_cast %43 : vector<1x64xf32> to vector<1x64xf32>
    %45 = vector.broadcast %44 : vector<1x64xf32> to vector<8x64xf32>
    %46 = vector.extract_strided_slice %2 {offsets = [12, 0], sizes = [1, 64], strides = [1, 1]} : vector<16x64xf32> to vector<1x64xf32>
    %47 = vector.shape_cast %46 : vector<1x64xf32> to vector<1x64xf32>
    %48 = vector.broadcast %47 : vector<1x64xf32> to vector<8x64xf32>
    %49 = vector.extract_strided_slice %2 {offsets = [13, 0], sizes = [1, 64], strides = [1, 1]} : vector<16x64xf32> to vector<1x64xf32>
    %50 = vector.shape_cast %49 : vector<1x64xf32> to vector<1x64xf32>
    %51 = vector.broadcast %50 : vector<1x64xf32> to vector<8x64xf32>
    %52 = vector.extract_strided_slice %2 {offsets = [14, 0], sizes = [1, 64], strides = [1, 1]} : vector<16x64xf32> to vector<1x64xf32>
    %53 = vector.shape_cast %52 : vector<1x64xf32> to vector<1x64xf32>
    %54 = vector.broadcast %53 : vector<1x64xf32> to vector<8x64xf32>
    %55 = vector.extract_strided_slice %2 {offsets = [15, 0], sizes = [1, 64], strides = [1, 1]} : vector<16x64xf32> to vector<1x64xf32>
    %56 = vector.shape_cast %55 : vector<1x64xf32> to vector<1x64xf32>
    %57 = vector.broadcast %56 : vector<1x64xf32> to vector<8x64xf32>
    %58 = vector.shape_cast %3 : vector<1x64xf32> to vector<1x64xf32>
    %59 = vector.broadcast %58 : vector<1x64xf32> to vector<8x64xf32>
    %cst = arith.constant 0.000000e+00 : f32
    %60 = vector.broadcast %cst : f32 to vector<8x16xf32>
    %cst_5 = arith.constant 0.000000e+00 : f32
    %61 = vector.broadcast %cst_5 : f32 to vector<8x16xf32>
    %62 = vector.extract_strided_slice %0 {offsets = [0, 0], sizes = [8, 1], strides = [1, 1]} : vector<8x16xf32> to vector<8x1xf32>
    %63 = vector.broadcast %62 : vector<8x1xf32> to vector<8x64xf32>
    %64 = arith.mulf %63, %6 : vector<8x64xf32>
    %65 = arith.addf %59, %64 : vector<8x64xf32>
    %66 = vector.extract_strided_slice %0 {offsets = [0, 1], sizes = [8, 1], strides = [1, 1]} : vector<8x16xf32> to vector<8x1xf32>
    %67 = vector.broadcast %66 : vector<8x1xf32> to vector<8x64xf32>
    %68 = arith.mulf %67, %9 : vector<8x64xf32>
    %69 = arith.addf %65, %68 : vector<8x64xf32>
    %70 = vector.extract_strided_slice %60 {offsets = [0, 0], sizes = [8, 1], strides = [1, 1]} : vector<8x16xf32> to vector<8x1xf32>
    %71 = vector.broadcast %70 : vector<8x1xf32> to vector<8x64xf32>
    %72 = arith.mulf %71, %12 : vector<8x64xf32>
    %73 = arith.addf %69, %72 : vector<8x64xf32>
    %74 = vector.extract_strided_slice %60 {offsets = [0, 1], sizes = [8, 1], strides = [1, 1]} : vector<8x16xf32> to vector<8x1xf32>
    %75 = vector.broadcast %74 : vector<8x1xf32> to vector<8x64xf32>
    %76 = arith.mulf %75, %15 : vector<8x64xf32>
    %77 = arith.addf %73, %76 : vector<8x64xf32>
    %78 = vector.extract_strided_slice %60 {offsets = [0, 2], sizes = [8, 1], strides = [1, 1]} : vector<8x16xf32> to vector<8x1xf32>
    %79 = vector.broadcast %78 : vector<8x1xf32> to vector<8x64xf32>
    %80 = arith.mulf %79, %18 : vector<8x64xf32>
    %81 = arith.addf %77, %80 : vector<8x64xf32>
    %82 = vector.extract_strided_slice %60 {offsets = [0, 3], sizes = [8, 1], strides = [1, 1]} : vector<8x16xf32> to vector<8x1xf32>
    %83 = vector.broadcast %82 : vector<8x1xf32> to vector<8x64xf32>
    %84 = arith.mulf %83, %21 : vector<8x64xf32>
    %85 = arith.addf %81, %84 : vector<8x64xf32>
    %86 = vector.extract_strided_slice %60 {offsets = [0, 4], sizes = [8, 1], strides = [1, 1]} : vector<8x16xf32> to vector<8x1xf32>
    %87 = vector.broadcast %86 : vector<8x1xf32> to vector<8x64xf32>
    %88 = arith.mulf %87, %24 : vector<8x64xf32>
    %89 = arith.addf %85, %88 : vector<8x64xf32>
    %90 = vector.extract_strided_slice %60 {offsets = [0, 5], sizes = [8, 1], strides = [1, 1]} : vector<8x16xf32> to vector<8x1xf32>
    %91 = vector.broadcast %90 : vector<8x1xf32> to vector<8x64xf32>
    %92 = arith.mulf %91, %27 : vector<8x64xf32>
    %93 = arith.addf %89, %92 : vector<8x64xf32>
    %94 = vector.extract_strided_slice %60 {offsets = [0, 6], sizes = [8, 1], strides = [1, 1]} : vector<8x16xf32> to vector<8x1xf32>
    %95 = vector.broadcast %94 : vector<8x1xf32> to vector<8x64xf32>
    %96 = arith.mulf %95, %30 : vector<8x64xf32>
    %97 = arith.addf %93, %96 : vector<8x64xf32>
    %98 = vector.extract_strided_slice %60 {offsets = [0, 7], sizes = [8, 1], strides = [1, 1]} : vector<8x16xf32> to vector<8x1xf32>
    %99 = vector.broadcast %98 : vector<8x1xf32> to vector<8x64xf32>
    %100 = arith.mulf %99, %33 : vector<8x64xf32>
    %101 = arith.addf %97, %100 : vector<8x64xf32>
    %102 = vector.extract_strided_slice %60 {offsets = [0, 8], sizes = [8, 1], strides = [1, 1]} : vector<8x16xf32> to vector<8x1xf32>
    %103 = vector.broadcast %102 : vector<8x1xf32> to vector<8x64xf32>
    %104 = arith.mulf %103, %36 : vector<8x64xf32>
    %105 = arith.addf %101, %104 : vector<8x64xf32>
    %106 = vector.extract_strided_slice %60 {offsets = [0, 9], sizes = [8, 1], strides = [1, 1]} : vector<8x16xf32> to vector<8x1xf32>
    %107 = vector.broadcast %106 : vector<8x1xf32> to vector<8x64xf32>
    %108 = arith.mulf %107, %39 : vector<8x64xf32>
    %109 = arith.addf %105, %108 : vector<8x64xf32>
    %110 = vector.extract_strided_slice %60 {offsets = [0, 10], sizes = [8, 1], strides = [1, 1]} : vector<8x16xf32> to vector<8x1xf32>
    %111 = vector.broadcast %110 : vector<8x1xf32> to vector<8x64xf32>
    %112 = arith.mulf %111, %42 : vector<8x64xf32>
    %113 = arith.addf %109, %112 : vector<8x64xf32>
    %114 = vector.extract_strided_slice %60 {offsets = [0, 11], sizes = [8, 1], strides = [1, 1]} : vector<8x16xf32> to vector<8x1xf32>
    %115 = vector.broadcast %114 : vector<8x1xf32> to vector<8x64xf32>
    %116 = arith.mulf %115, %45 : vector<8x64xf32>
    %117 = arith.addf %113, %116 : vector<8x64xf32>
    %118 = vector.extract_strided_slice %60 {offsets = [0, 12], sizes = [8, 1], strides = [1, 1]} : vector<8x16xf32> to vector<8x1xf32>
    %119 = vector.broadcast %118 : vector<8x1xf32> to vector<8x64xf32>
    %120 = arith.mulf %119, %48 : vector<8x64xf32>
    %121 = arith.addf %117, %120 : vector<8x64xf32>
    %122 = vector.extract_strided_slice %60 {offsets = [0, 13], sizes = [8, 1], strides = [1, 1]} : vector<8x16xf32> to vector<8x1xf32>
    %123 = vector.broadcast %122 : vector<8x1xf32> to vector<8x64xf32>
    %124 = arith.mulf %123, %51 : vector<8x64xf32>
    %125 = arith.addf %121, %124 : vector<8x64xf32>
    %126 = vector.extract_strided_slice %60 {offsets = [0, 14], sizes = [8, 1], strides = [1, 1]} : vector<8x16xf32> to vector<8x1xf32>
    %127 = vector.broadcast %126 : vector<8x1xf32> to vector<8x64xf32>
    %128 = arith.mulf %127, %54 : vector<8x64xf32>
    %129 = arith.addf %125, %128 : vector<8x64xf32>
    %130 = vector.extract_strided_slice %60 {offsets = [0, 15], sizes = [8, 1], strides = [1, 1]} : vector<8x16xf32> to vector<8x1xf32>
    %131 = vector.broadcast %130 : vector<8x1xf32> to vector<8x64xf32>
    %132 = arith.mulf %131, %57 : vector<8x64xf32>
    %133 = arith.addf %129, %132 : vector<8x64xf32>
    %134 = arith.negf %133 : vector<8x64xf32>
    %135 = math.exp %134 : vector<8x64xf32>
    %cst_6 = arith.constant 1.000000e+00 : f32
    %136 = vector.broadcast %cst_6 : f32 to vector<8x64xf32>
    %137 = arith.addf %136, %135 : vector<8x64xf32>
    %138 = arith.divf %136, %137 : vector<8x64xf32>
    %139 = vector.extract_strided_slice %138 {offsets = [0, 0], sizes = [8, 16], strides = [1, 1]} : vector<8x64xf32> to vector<8x16xf32>
    %140 = vector.extract_strided_slice %138 {offsets = [0, 16], sizes = [8, 16], strides = [1, 1]} : vector<8x64xf32> to vector<8x16xf32>
    %141 = vector.extract_strided_slice %138 {offsets = [0, 48], sizes = [8, 16], strides = [1, 1]} : vector<8x64xf32> to vector<8x16xf32>
    %142 = vector.extract_strided_slice %133 {offsets = [0, 32], sizes = [8, 16], strides = [1, 1]} : vector<8x64xf32> to vector<8x16xf32>
    %143 = math.tanh %142 : vector<8x16xf32>
    %144 = arith.mulf %140, %61 : vector<8x16xf32>
    %145 = arith.mulf %139, %143 : vector<8x16xf32>
    %146 = arith.addf %144, %145 : vector<8x16xf32>
    %147 = math.tanh %146 : vector<8x16xf32>
    %148 = arith.mulf %141, %147 : vector<8x16xf32>
    %149 = vector.extract_strided_slice %0 {offsets = [0, 2], sizes = [8, 1], strides = [1, 1]} : vector<8x16xf32> to vector<8x1xf32>
    %150 = vector.broadcast %149 : vector<8x1xf32> to vector<8x64xf32>
    %151 = arith.mulf %150, %6 : vector<8x64xf32>
    %152 = arith.addf %59, %151 : vector<8x64xf32>
    %153 = vector.extract_strided_slice %0 {offsets = [0, 3], sizes = [8, 1], strides = [1, 1]} : vector<8x16xf32> to vector<8x1xf32>
    %154 = vector.broadcast %153 : vector<8x1xf32> to vector<8x64xf32>
    %155 = arith.mulf %154, %9 : vector<8x64xf32>
    %156 = arith.addf %152, %155 : vector<8x64xf32>
    %157 = vector.extract_strided_slice %148 {offsets = [0, 0], sizes = [8, 1], strides = [1, 1]} : vector<8x16xf32> to vector<8x1xf32>
    %158 = vector.broadcast %157 : vector<8x1xf32> to vector<8x64xf32>
    %159 = arith.mulf %158, %12 : vector<8x64xf32>
    %160 = arith.addf %156, %159 : vector<8x64xf32>
    %161 = vector.extract_strided_slice %148 {offsets = [0, 1], sizes = [8, 1], strides = [1, 1]} : vector<8x16xf32> to vector<8x1xf32>
    %162 = vector.broadcast %161 : vector<8x1xf32> to vector<8x64xf32>
    %163 = arith.mulf %162, %15 : vector<8x64xf32>
    %164 = arith.addf %160, %163 : vector<8x64xf32>
    %165 = vector.extract_strided_slice %148 {offsets = [0, 2], sizes = [8, 1], strides = [1, 1]} : vector<8x16xf32> to vector<8x1xf32>
    %166 = vector.broadcast %165 : vector<8x1xf32> to vector<8x64xf32>
    %167 = arith.mulf %166, %18 : vector<8x64xf32>
    %168 = arith.addf %164, %167 : vector<8x64xf32>
    %169 = vector.extract_strided_slice %148 {offsets = [0, 3], sizes = [8, 1], strides = [1, 1]} : vector<8x16xf32> to vector<8x1xf32>
    %170 = vector.broadcast %169 : vector<8x1xf32> to vector<8x64xf32>
    %171 = arith.mulf %170, %21 : vector<8x64xf32>
    %172 = arith.addf %168, %171 : vector<8x64xf32>
    %173 = vector.extract_strided_slice %148 {offsets = [0, 4], sizes = [8, 1], strides = [1, 1]} : vector<8x16xf32> to vector<8x1xf32>
    %174 = vector.broadcast %173 : vector<8x1xf32> to vector<8x64xf32>
    %175 = arith.mulf %174, %24 : vector<8x64xf32>
    %176 = arith.addf %172, %175 : vector<8x64xf32>
    %177 = vector.extract_strided_slice %148 {offsets = [0, 5], sizes = [8, 1], strides = [1, 1]} : vector<8x16xf32> to vector<8x1xf32>
    %178 = vector.broadcast %177 : vector<8x1xf32> to vector<8x64xf32>
    %179 = arith.mulf %178, %27 : vector<8x64xf32>
    %180 = arith.addf %176, %179 : vector<8x64xf32>
    %181 = vector.extract_strided_slice %148 {offsets = [0, 6], sizes = [8, 1], strides = [1, 1]} : vector<8x16xf32> to vector<8x1xf32>
    %182 = vector.broadcast %181 : vector<8x1xf32> to vector<8x64xf32>
    %183 = arith.mulf %182, %30 : vector<8x64xf32>
    %184 = arith.addf %180, %183 : vector<8x64xf32>
    %185 = vector.extract_strided_slice %148 {offsets = [0, 7], sizes = [8, 1], strides = [1, 1]} : vector<8x16xf32> to vector<8x1xf32>
    %186 = vector.broadcast %185 : vector<8x1xf32> to vector<8x64xf32>
    %187 = arith.mulf %186, %33 : vector<8x64xf32>
    %188 = arith.addf %184, %187 : vector<8x64xf32>
    %189 = vector.extract_strided_slice %148 {offsets = [0, 8], sizes = [8, 1], strides = [1, 1]} : vector<8x16xf32> to vector<8x1xf32>
    %190 = vector.broadcast %189 : vector<8x1xf32> to vector<8x64xf32>
    %191 = arith.mulf %190, %36 : vector<8x64xf32>
    %192 = arith.addf %188, %191 : vector<8x64xf32>
    %193 = vector.extract_strided_slice %148 {offsets = [0, 9], sizes = [8, 1], strides = [1, 1]} : vector<8x16xf32> to vector<8x1xf32>
    %194 = vector.broadcast %193 : vector<8x1xf32> to vector<8x64xf32>
    %195 = arith.mulf %194, %39 : vector<8x64xf32>
    %196 = arith.addf %192, %195 : vector<8x64xf32>
    %197 = vector.extract_strided_slice %148 {offsets = [0, 10], sizes = [8, 1], strides = [1, 1]} : vector<8x16xf32> to vector<8x1xf32>
    %198 = vector.broadcast %197 : vector<8x1xf32> to vector<8x64xf32>
    %199 = arith.mulf %198, %42 : vector<8x64xf32>
    %200 = arith.addf %196, %199 : vector<8x64xf32>
    %201 = vector.extract_strided_slice %148 {offsets = [0, 11], sizes = [8, 1], strides = [1, 1]} : vector<8x16xf32> to vector<8x1xf32>
    %202 = vector.broadcast %201 : vector<8x1xf32> to vector<8x64xf32>
    %203 = arith.mulf %202, %45 : vector<8x64xf32>
    %204 = arith.addf %200, %203 : vector<8x64xf32>
    %205 = vector.extract_strided_slice %148 {offsets = [0, 12], sizes = [8, 1], strides = [1, 1]} : vector<8x16xf32> to vector<8x1xf32>
    %206 = vector.broadcast %205 : vector<8x1xf32> to vector<8x64xf32>
    %207 = arith.mulf %206, %48 : vector<8x64xf32>
    %208 = arith.addf %204, %207 : vector<8x64xf32>
    %209 = vector.extract_strided_slice %148 {offsets = [0, 13], sizes = [8, 1], strides = [1, 1]} : vector<8x16xf32> to vector<8x1xf32>
    %210 = vector.broadcast %209 : vector<8x1xf32> to vector<8x64xf32>
    %211 = arith.mulf %210, %51 : vector<8x64xf32>
    %212 = arith.addf %208, %211 : vector<8x64xf32>
    %213 = vector.extract_strided_slice %148 {offsets = [0, 14], sizes = [8, 1], strides = [1, 1]} : vector<8x16xf32> to vector<8x1xf32>
    %214 = vector.broadcast %213 : vector<8x1xf32> to vector<8x64xf32>
    %215 = arith.mulf %214, %54 : vector<8x64xf32>
    %216 = arith.addf %212, %215 : vector<8x64xf32>
    %217 = vector.extract_strided_slice %148 {offsets = [0, 15], sizes = [8, 1], strides = [1, 1]} : vector<8x16xf32> to vector<8x1xf32>
    %218 = vector.broadcast %217 : vector<8x1xf32> to vector<8x64xf32>
    %219 = arith.mulf %218, %57 : vector<8x64xf32>
    %220 = arith.addf %216, %219 : vector<8x64xf32>
    %221 = arith.negf %220 : vector<8x64xf32>
    %222 = math.exp %221 : vector<8x64xf32>
    %cst_7 = arith.constant 1.000000e+00 : f32
    %223 = vector.broadcast %cst_7 : f32 to vector<8x64xf32>
    %224 = arith.addf %223, %222 : vector<8x64xf32>
    %225 = arith.divf %223, %224 : vector<8x64xf32>
    %226 = vector.extract_strided_slice %225 {offsets = [0, 0], sizes = [8, 16], strides = [1, 1]} : vector<8x64xf32> to vector<8x16xf32>
    %227 = vector.extract_strided_slice %225 {offsets = [0, 16], sizes = [8, 16], strides = [1, 1]} : vector<8x64xf32> to vector<8x16xf32>
    %228 = vector.extract_strided_slice %225 {offsets = [0, 48], sizes = [8, 16], strides = [1, 1]} : vector<8x64xf32> to vector<8x16xf32>
    %229 = vector.extract_strided_slice %220 {offsets = [0, 32], sizes = [8, 16], strides = [1, 1]} : vector<8x64xf32> to vector<8x16xf32>
    %230 = math.tanh %229 : vector<8x16xf32>
    %231 = arith.mulf %227, %146 : vector<8x16xf32>
    %232 = arith.mulf %226, %230 : vector<8x16xf32>
    %233 = arith.addf %231, %232 : vector<8x16xf32>
    %234 = math.tanh %233 : vector<8x16xf32>
    %235 = arith.mulf %228, %234 : vector<8x16xf32>
    %236 = vector.extract_strided_slice %0 {offsets = [0, 4], sizes = [8, 1], strides = [1, 1]} : vector<8x16xf32> to vector<8x1xf32>
    %237 = vector.broadcast %236 : vector<8x1xf32> to vector<8x64xf32>
    %238 = arith.mulf %237, %6 : vector<8x64xf32>
    %239 = arith.addf %59, %238 : vector<8x64xf32>
    %240 = vector.extract_strided_slice %0 {offsets = [0, 5], sizes = [8, 1], strides = [1, 1]} : vector<8x16xf32> to vector<8x1xf32>
    %241 = vector.broadcast %240 : vector<8x1xf32> to vector<8x64xf32>
    %242 = arith.mulf %241, %9 : vector<8x64xf32>
    %243 = arith.addf %239, %242 : vector<8x64xf32>
    %244 = vector.extract_strided_slice %235 {offsets = [0, 0], sizes = [8, 1], strides = [1, 1]} : vector<8x16xf32> to vector<8x1xf32>
    %245 = vector.broadcast %244 : vector<8x1xf32> to vector<8x64xf32>
    %246 = arith.mulf %245, %12 : vector<8x64xf32>
    %247 = arith.addf %243, %246 : vector<8x64xf32>
    %248 = vector.extract_strided_slice %235 {offsets = [0, 1], sizes = [8, 1], strides = [1, 1]} : vector<8x16xf32> to vector<8x1xf32>
    %249 = vector.broadcast %248 : vector<8x1xf32> to vector<8x64xf32>
    %250 = arith.mulf %249, %15 : vector<8x64xf32>
    %251 = arith.addf %247, %250 : vector<8x64xf32>
    %252 = vector.extract_strided_slice %235 {offsets = [0, 2], sizes = [8, 1], strides = [1, 1]} : vector<8x16xf32> to vector<8x1xf32>
    %253 = vector.broadcast %252 : vector<8x1xf32> to vector<8x64xf32>
    %254 = arith.mulf %253, %18 : vector<8x64xf32>
    %255 = arith.addf %251, %254 : vector<8x64xf32>
    %256 = vector.extract_strided_slice %235 {offsets = [0, 3], sizes = [8, 1], strides = [1, 1]} : vector<8x16xf32> to vector<8x1xf32>
    %257 = vector.broadcast %256 : vector<8x1xf32> to vector<8x64xf32>
    %258 = arith.mulf %257, %21 : vector<8x64xf32>
    %259 = arith.addf %255, %258 : vector<8x64xf32>
    %260 = vector.extract_strided_slice %235 {offsets = [0, 4], sizes = [8, 1], strides = [1, 1]} : vector<8x16xf32> to vector<8x1xf32>
    %261 = vector.broadcast %260 : vector<8x1xf32> to vector<8x64xf32>
    %262 = arith.mulf %261, %24 : vector<8x64xf32>
    %263 = arith.addf %259, %262 : vector<8x64xf32>
    %264 = vector.extract_strided_slice %235 {offsets = [0, 5], sizes = [8, 1], strides = [1, 1]} : vector<8x16xf32> to vector<8x1xf32>
    %265 = vector.broadcast %264 : vector<8x1xf32> to vector<8x64xf32>
    %266 = arith.mulf %265, %27 : vector<8x64xf32>
    %267 = arith.addf %263, %266 : vector<8x64xf32>
    %268 = vector.extract_strided_slice %235 {offsets = [0, 6], sizes = [8, 1], strides = [1, 1]} : vector<8x16xf32> to vector<8x1xf32>
    %269 = vector.broadcast %268 : vector<8x1xf32> to vector<8x64xf32>
    %270 = arith.mulf %269, %30 : vector<8x64xf32>
    %271 = arith.addf %267, %270 : vector<8x64xf32>
    %272 = vector.extract_strided_slice %235 {offsets = [0, 7], sizes = [8, 1], strides = [1, 1]} : vector<8x16xf32> to vector<8x1xf32>
    %273 = vector.broadcast %272 : vector<8x1xf32> to vector<8x64xf32>
    %274 = arith.mulf %273, %33 : vector<8x64xf32>
    %275 = arith.addf %271, %274 : vector<8x64xf32>
    %276 = vector.extract_strided_slice %235 {offsets = [0, 8], sizes = [8, 1], strides = [1, 1]} : vector<8x16xf32> to vector<8x1xf32>
    %277 = vector.broadcast %276 : vector<8x1xf32> to vector<8x64xf32>
    %278 = arith.mulf %277, %36 : vector<8x64xf32>
    %279 = arith.addf %275, %278 : vector<8x64xf32>
    %280 = vector.extract_strided_slice %235 {offsets = [0, 9], sizes = [8, 1], strides = [1, 1]} : vector<8x16xf32> to vector<8x1xf32>
    %281 = vector.broadcast %280 : vector<8x1xf32> to vector<8x64xf32>
    %282 = arith.mulf %281, %39 : vector<8x64xf32>
    %283 = arith.addf %279, %282 : vector<8x64xf32>
    %284 = vector.extract_strided_slice %235 {offsets = [0, 10], sizes = [8, 1], strides = [1, 1]} : vector<8x16xf32> to vector<8x1xf32>
    %285 = vector.broadcast %284 : vector<8x1xf32> to vector<8x64xf32>
    %286 = arith.mulf %285, %42 : vector<8x64xf32>
    %287 = arith.addf %283, %286 : vector<8x64xf32>
    %288 = vector.extract_strided_slice %235 {offsets = [0, 11], sizes = [8, 1], strides = [1, 1]} : vector<8x16xf32> to vector<8x1xf32>
    %289 = vector.broadcast %288 : vector<8x1xf32> to vector<8x64xf32>
    %290 = arith.mulf %289, %45 : vector<8x64xf32>
    %291 = arith.addf %287, %290 : vector<8x64xf32>
    %292 = vector.extract_strided_slice %235 {offsets = [0, 12], sizes = [8, 1], strides = [1, 1]} : vector<8x16xf32> to vector<8x1xf32>
    %293 = vector.broadcast %292 : vector<8x1xf32> to vector<8x64xf32>
    %294 = arith.mulf %293, %48 : vector<8x64xf32>
    %295 = arith.addf %291, %294 : vector<8x64xf32>
    %296 = vector.extract_strided_slice %235 {offsets = [0, 13], sizes = [8, 1], strides = [1, 1]} : vector<8x16xf32> to vector<8x1xf32>
    %297 = vector.broadcast %296 : vector<8x1xf32> to vector<8x64xf32>
    %298 = arith.mulf %297, %51 : vector<8x64xf32>
    %299 = arith.addf %295, %298 : vector<8x64xf32>
    %300 = vector.extract_strided_slice %235 {offsets = [0, 14], sizes = [8, 1], strides = [1, 1]} : vector<8x16xf32> to vector<8x1xf32>
    %301 = vector.broadcast %300 : vector<8x1xf32> to vector<8x64xf32>
    %302 = arith.mulf %301, %54 : vector<8x64xf32>
    %303 = arith.addf %299, %302 : vector<8x64xf32>
    %304 = vector.extract_strided_slice %235 {offsets = [0, 15], sizes = [8, 1], strides = [1, 1]} : vector<8x16xf32> to vector<8x1xf32>
    %305 = vector.broadcast %304 : vector<8x1xf32> to vector<8x64xf32>
    %306 = arith.mulf %305, %57 : vector<8x64xf32>
    %307 = arith.addf %303, %306 : vector<8x64xf32>
    %308 = arith.negf %307 : vector<8x64xf32>
    %309 = math.exp %308 : vector<8x64xf32>
    %cst_8 = arith.constant 1.000000e+00 : f32
    %310 = vector.broadcast %cst_8 : f32 to vector<8x64xf32>
    %311 = arith.addf %310, %309 : vector<8x64xf32>
    %312 = arith.divf %310, %311 : vector<8x64xf32>
    %313 = vector.extract_strided_slice %312 {offsets = [0, 0], sizes = [8, 16], strides = [1, 1]} : vector<8x64xf32> to vector<8x16xf32>
    %314 = vector.extract_strided_slice %312 {offsets = [0, 16], sizes = [8, 16], strides = [1, 1]} : vector<8x64xf32> to vector<8x16xf32>
    %315 = vector.extract_strided_slice %312 {offsets = [0, 48], sizes = [8, 16], strides = [1, 1]} : vector<8x64xf32> to vector<8x16xf32>
    %316 = vector.extract_strided_slice %307 {offsets = [0, 32], sizes = [8, 16], strides = [1, 1]} : vector<8x64xf32> to vector<8x16xf32>
    %317 = math.tanh %316 : vector<8x16xf32>
    %318 = arith.mulf %314, %233 : vector<8x16xf32>
    %319 = arith.mulf %313, %317 : vector<8x16xf32>
    %320 = arith.addf %318, %319 : vector<8x16xf32>
    %321 = math.tanh %320 : vector<8x16xf32>
    %322 = arith.mulf %315, %321 : vector<8x16xf32>
    %323 = vector.extract_strided_slice %0 {offsets = [0, 6], sizes = [8, 1], strides = [1, 1]} : vector<8x16xf32> to vector<8x1xf32>
    %324 = vector.broadcast %323 : vector<8x1xf32> to vector<8x64xf32>
    %325 = arith.mulf %324, %6 : vector<8x64xf32>
    %326 = arith.addf %59, %325 : vector<8x64xf32>
    %327 = vector.extract_strided_slice %0 {offsets = [0, 7], sizes = [8, 1], strides = [1, 1]} : vector<8x16xf32> to vector<8x1xf32>
    %328 = vector.broadcast %327 : vector<8x1xf32> to vector<8x64xf32>
    %329 = arith.mulf %328, %9 : vector<8x64xf32>
    %330 = arith.addf %326, %329 : vector<8x64xf32>
    %331 = vector.extract_strided_slice %322 {offsets = [0, 0], sizes = [8, 1], strides = [1, 1]} : vector<8x16xf32> to vector<8x1xf32>
    %332 = vector.broadcast %331 : vector<8x1xf32> to vector<8x64xf32>
    %333 = arith.mulf %332, %12 : vector<8x64xf32>
    %334 = arith.addf %330, %333 : vector<8x64xf32>
    %335 = vector.extract_strided_slice %322 {offsets = [0, 1], sizes = [8, 1], strides = [1, 1]} : vector<8x16xf32> to vector<8x1xf32>
    %336 = vector.broadcast %335 : vector<8x1xf32> to vector<8x64xf32>
    %337 = arith.mulf %336, %15 : vector<8x64xf32>
    %338 = arith.addf %334, %337 : vector<8x64xf32>
    %339 = vector.extract_strided_slice %322 {offsets = [0, 2], sizes = [8, 1], strides = [1, 1]} : vector<8x16xf32> to vector<8x1xf32>
    %340 = vector.broadcast %339 : vector<8x1xf32> to vector<8x64xf32>
    %341 = arith.mulf %340, %18 : vector<8x64xf32>
    %342 = arith.addf %338, %341 : vector<8x64xf32>
    %343 = vector.extract_strided_slice %322 {offsets = [0, 3], sizes = [8, 1], strides = [1, 1]} : vector<8x16xf32> to vector<8x1xf32>
    %344 = vector.broadcast %343 : vector<8x1xf32> to vector<8x64xf32>
    %345 = arith.mulf %344, %21 : vector<8x64xf32>
    %346 = arith.addf %342, %345 : vector<8x64xf32>
    %347 = vector.extract_strided_slice %322 {offsets = [0, 4], sizes = [8, 1], strides = [1, 1]} : vector<8x16xf32> to vector<8x1xf32>
    %348 = vector.broadcast %347 : vector<8x1xf32> to vector<8x64xf32>
    %349 = arith.mulf %348, %24 : vector<8x64xf32>
    %350 = arith.addf %346, %349 : vector<8x64xf32>
    %351 = vector.extract_strided_slice %322 {offsets = [0, 5], sizes = [8, 1], strides = [1, 1]} : vector<8x16xf32> to vector<8x1xf32>
    %352 = vector.broadcast %351 : vector<8x1xf32> to vector<8x64xf32>
    %353 = arith.mulf %352, %27 : vector<8x64xf32>
    %354 = arith.addf %350, %353 : vector<8x64xf32>
    %355 = vector.extract_strided_slice %322 {offsets = [0, 6], sizes = [8, 1], strides = [1, 1]} : vector<8x16xf32> to vector<8x1xf32>
    %356 = vector.broadcast %355 : vector<8x1xf32> to vector<8x64xf32>
    %357 = arith.mulf %356, %30 : vector<8x64xf32>
    %358 = arith.addf %354, %357 : vector<8x64xf32>
    %359 = vector.extract_strided_slice %322 {offsets = [0, 7], sizes = [8, 1], strides = [1, 1]} : vector<8x16xf32> to vector<8x1xf32>
    %360 = vector.broadcast %359 : vector<8x1xf32> to vector<8x64xf32>
    %361 = arith.mulf %360, %33 : vector<8x64xf32>
    %362 = arith.addf %358, %361 : vector<8x64xf32>
    %363 = vector.extract_strided_slice %322 {offsets = [0, 8], sizes = [8, 1], strides = [1, 1]} : vector<8x16xf32> to vector<8x1xf32>
    %364 = vector.broadcast %363 : vector<8x1xf32> to vector<8x64xf32>
    %365 = arith.mulf %364, %36 : vector<8x64xf32>
    %366 = arith.addf %362, %365 : vector<8x64xf32>
    %367 = vector.extract_strided_slice %322 {offsets = [0, 9], sizes = [8, 1], strides = [1, 1]} : vector<8x16xf32> to vector<8x1xf32>
    %368 = vector.broadcast %367 : vector<8x1xf32> to vector<8x64xf32>
    %369 = arith.mulf %368, %39 : vector<8x64xf32>
    %370 = arith.addf %366, %369 : vector<8x64xf32>
    %371 = vector.extract_strided_slice %322 {offsets = [0, 10], sizes = [8, 1], strides = [1, 1]} : vector<8x16xf32> to vector<8x1xf32>
    %372 = vector.broadcast %371 : vector<8x1xf32> to vector<8x64xf32>
    %373 = arith.mulf %372, %42 : vector<8x64xf32>
    %374 = arith.addf %370, %373 : vector<8x64xf32>
    %375 = vector.extract_strided_slice %322 {offsets = [0, 11], sizes = [8, 1], strides = [1, 1]} : vector<8x16xf32> to vector<8x1xf32>
    %376 = vector.broadcast %375 : vector<8x1xf32> to vector<8x64xf32>
    %377 = arith.mulf %376, %45 : vector<8x64xf32>
    %378 = arith.addf %374, %377 : vector<8x64xf32>
    %379 = vector.extract_strided_slice %322 {offsets = [0, 12], sizes = [8, 1], strides = [1, 1]} : vector<8x16xf32> to vector<8x1xf32>
    %380 = vector.broadcast %379 : vector<8x1xf32> to vector<8x64xf32>
    %381 = arith.mulf %380, %48 : vector<8x64xf32>
    %382 = arith.addf %378, %381 : vector<8x64xf32>
    %383 = vector.extract_strided_slice %322 {offsets = [0, 13], sizes = [8, 1], strides = [1, 1]} : vector<8x16xf32> to vector<8x1xf32>
    %384 = vector.broadcast %383 : vector<8x1xf32> to vector<8x64xf32>
    %385 = arith.mulf %384, %51 : vector<8x64xf32>
    %386 = arith.addf %382, %385 : vector<8x64xf32>
    %387 = vector.extract_strided_slice %322 {offsets = [0, 14], sizes = [8, 1], strides = [1, 1]} : vector<8x16xf32> to vector<8x1xf32>
    %388 = vector.broadcast %387 : vector<8x1xf32> to vector<8x64xf32>
    %389 = arith.mulf %388, %54 : vector<8x64xf32>
    %390 = arith.addf %386, %389 : vector<8x64xf32>
    %391 = vector.extract_strided_slice %322 {offsets = [0, 15], sizes = [8, 1], strides = [1, 1]} : vector<8x16xf32> to vector<8x1xf32>
    %392 = vector.broadcast %391 : vector<8x1xf32> to vector<8x64xf32>
    %393 = arith.mulf %392, %57 : vector<8x64xf32>
    %394 = arith.addf %390, %393 : vector<8x64xf32>
    %395 = arith.negf %394 : vector<8x64xf32>
    %396 = math.exp %395 : vector<8x64xf32>
    %cst_9 = arith.constant 1.000000e+00 : f32
    %397 = vector.broadcast %cst_9 : f32 to vector<8x64xf32>
    %398 = arith.addf %397, %396 : vector<8x64xf32>
    %399 = arith.divf %397, %398 : vector<8x64xf32>
    %400 = vector.extract_strided_slice %399 {offsets = [0, 0], sizes = [8, 16], strides = [1, 1]} : vector<8x64xf32> to vector<8x16xf32>
    %401 = vector.extract_strided_slice %399 {offsets = [0, 16], sizes = [8, 16], strides = [1, 1]} : vector<8x64xf32> to vector<8x16xf32>
    %402 = vector.extract_strided_slice %399 {offsets = [0, 48], sizes = [8, 16], strides = [1, 1]} : vector<8x64xf32> to vector<8x16xf32>
    %403 = vector.extract_strided_slice %394 {offsets = [0, 32], sizes = [8, 16], strides = [1, 1]} : vector<8x64xf32> to vector<8x16xf32>
    %404 = math.tanh %403 : vector<8x16xf32>
    %405 = arith.mulf %401, %320 : vector<8x16xf32>
    %406 = arith.mulf %400, %404 : vector<8x16xf32>
    %407 = arith.addf %405, %406 : vector<8x16xf32>
    %408 = math.tanh %407 : vector<8x16xf32>
    %409 = arith.mulf %402, %408 : vector<8x16xf32>
    %410 = vector.extract_strided_slice %0 {offsets = [0, 8], sizes = [8, 1], strides = [1, 1]} : vector<8x16xf32> to vector<8x1xf32>
    %411 = vector.broadcast %410 : vector<8x1xf32> to vector<8x64xf32>
    %412 = arith.mulf %411, %6 : vector<8x64xf32>
    %413 = arith.addf %59, %412 : vector<8x64xf32>
    %414 = vector.extract_strided_slice %0 {offsets = [0, 9], sizes = [8, 1], strides = [1, 1]} : vector<8x16xf32> to vector<8x1xf32>
    %415 = vector.broadcast %414 : vector<8x1xf32> to vector<8x64xf32>
    %416 = arith.mulf %415, %9 : vector<8x64xf32>
    %417 = arith.addf %413, %416 : vector<8x64xf32>
    %418 = vector.extract_strided_slice %409 {offsets = [0, 0], sizes = [8, 1], strides = [1, 1]} : vector<8x16xf32> to vector<8x1xf32>
    %419 = vector.broadcast %418 : vector<8x1xf32> to vector<8x64xf32>
    %420 = arith.mulf %419, %12 : vector<8x64xf32>
    %421 = arith.addf %417, %420 : vector<8x64xf32>
    %422 = vector.extract_strided_slice %409 {offsets = [0, 1], sizes = [8, 1], strides = [1, 1]} : vector<8x16xf32> to vector<8x1xf32>
    %423 = vector.broadcast %422 : vector<8x1xf32> to vector<8x64xf32>
    %424 = arith.mulf %423, %15 : vector<8x64xf32>
    %425 = arith.addf %421, %424 : vector<8x64xf32>
    %426 = vector.extract_strided_slice %409 {offsets = [0, 2], sizes = [8, 1], strides = [1, 1]} : vector<8x16xf32> to vector<8x1xf32>
    %427 = vector.broadcast %426 : vector<8x1xf32> to vector<8x64xf32>
    %428 = arith.mulf %427, %18 : vector<8x64xf32>
    %429 = arith.addf %425, %428 : vector<8x64xf32>
    %430 = vector.extract_strided_slice %409 {offsets = [0, 3], sizes = [8, 1], strides = [1, 1]} : vector<8x16xf32> to vector<8x1xf32>
    %431 = vector.broadcast %430 : vector<8x1xf32> to vector<8x64xf32>
    %432 = arith.mulf %431, %21 : vector<8x64xf32>
    %433 = arith.addf %429, %432 : vector<8x64xf32>
    %434 = vector.extract_strided_slice %409 {offsets = [0, 4], sizes = [8, 1], strides = [1, 1]} : vector<8x16xf32> to vector<8x1xf32>
    %435 = vector.broadcast %434 : vector<8x1xf32> to vector<8x64xf32>
    %436 = arith.mulf %435, %24 : vector<8x64xf32>
    %437 = arith.addf %433, %436 : vector<8x64xf32>
    %438 = vector.extract_strided_slice %409 {offsets = [0, 5], sizes = [8, 1], strides = [1, 1]} : vector<8x16xf32> to vector<8x1xf32>
    %439 = vector.broadcast %438 : vector<8x1xf32> to vector<8x64xf32>
    %440 = arith.mulf %439, %27 : vector<8x64xf32>
    %441 = arith.addf %437, %440 : vector<8x64xf32>
    %442 = vector.extract_strided_slice %409 {offsets = [0, 6], sizes = [8, 1], strides = [1, 1]} : vector<8x16xf32> to vector<8x1xf32>
    %443 = vector.broadcast %442 : vector<8x1xf32> to vector<8x64xf32>
    %444 = arith.mulf %443, %30 : vector<8x64xf32>
    %445 = arith.addf %441, %444 : vector<8x64xf32>
    %446 = vector.extract_strided_slice %409 {offsets = [0, 7], sizes = [8, 1], strides = [1, 1]} : vector<8x16xf32> to vector<8x1xf32>
    %447 = vector.broadcast %446 : vector<8x1xf32> to vector<8x64xf32>
    %448 = arith.mulf %447, %33 : vector<8x64xf32>
    %449 = arith.addf %445, %448 : vector<8x64xf32>
    %450 = vector.extract_strided_slice %409 {offsets = [0, 8], sizes = [8, 1], strides = [1, 1]} : vector<8x16xf32> to vector<8x1xf32>
    %451 = vector.broadcast %450 : vector<8x1xf32> to vector<8x64xf32>
    %452 = arith.mulf %451, %36 : vector<8x64xf32>
    %453 = arith.addf %449, %452 : vector<8x64xf32>
    %454 = vector.extract_strided_slice %409 {offsets = [0, 9], sizes = [8, 1], strides = [1, 1]} : vector<8x16xf32> to vector<8x1xf32>
    %455 = vector.broadcast %454 : vector<8x1xf32> to vector<8x64xf32>
    %456 = arith.mulf %455, %39 : vector<8x64xf32>
    %457 = arith.addf %453, %456 : vector<8x64xf32>
    %458 = vector.extract_strided_slice %409 {offsets = [0, 10], sizes = [8, 1], strides = [1, 1]} : vector<8x16xf32> to vector<8x1xf32>
    %459 = vector.broadcast %458 : vector<8x1xf32> to vector<8x64xf32>
    %460 = arith.mulf %459, %42 : vector<8x64xf32>
    %461 = arith.addf %457, %460 : vector<8x64xf32>
    %462 = vector.extract_strided_slice %409 {offsets = [0, 11], sizes = [8, 1], strides = [1, 1]} : vector<8x16xf32> to vector<8x1xf32>
    %463 = vector.broadcast %462 : vector<8x1xf32> to vector<8x64xf32>
    %464 = arith.mulf %463, %45 : vector<8x64xf32>
    %465 = arith.addf %461, %464 : vector<8x64xf32>
    %466 = vector.extract_strided_slice %409 {offsets = [0, 12], sizes = [8, 1], strides = [1, 1]} : vector<8x16xf32> to vector<8x1xf32>
    %467 = vector.broadcast %466 : vector<8x1xf32> to vector<8x64xf32>
    %468 = arith.mulf %467, %48 : vector<8x64xf32>
    %469 = arith.addf %465, %468 : vector<8x64xf32>
    %470 = vector.extract_strided_slice %409 {offsets = [0, 13], sizes = [8, 1], strides = [1, 1]} : vector<8x16xf32> to vector<8x1xf32>
    %471 = vector.broadcast %470 : vector<8x1xf32> to vector<8x64xf32>
    %472 = arith.mulf %471, %51 : vector<8x64xf32>
    %473 = arith.addf %469, %472 : vector<8x64xf32>
    %474 = vector.extract_strided_slice %409 {offsets = [0, 14], sizes = [8, 1], strides = [1, 1]} : vector<8x16xf32> to vector<8x1xf32>
    %475 = vector.broadcast %474 : vector<8x1xf32> to vector<8x64xf32>
    %476 = arith.mulf %475, %54 : vector<8x64xf32>
    %477 = arith.addf %473, %476 : vector<8x64xf32>
    %478 = vector.extract_strided_slice %409 {offsets = [0, 15], sizes = [8, 1], strides = [1, 1]} : vector<8x16xf32> to vector<8x1xf32>
    %479 = vector.broadcast %478 : vector<8x1xf32> to vector<8x64xf32>
    %480 = arith.mulf %479, %57 : vector<8x64xf32>
    %481 = arith.addf %477, %480 : vector<8x64xf32>
    %482 = arith.negf %481 : vector<8x64xf32>
    %483 = math.exp %482 : vector<8x64xf32>
    %cst_10 = arith.constant 1.000000e+00 : f32
    %484 = vector.broadcast %cst_10 : f32 to vector<8x64xf32>
    %485 = arith.addf %484, %483 : vector<8x64xf32>
    %486 = arith.divf %484, %485 : vector<8x64xf32>
    %487 = vector.extract_strided_slice %486 {offsets = [0, 0], sizes = [8, 16], strides = [1, 1]} : vector<8x64xf32> to vector<8x16xf32>
    %488 = vector.extract_strided_slice %486 {offsets = [0, 16], sizes = [8, 16], strides = [1, 1]} : vector<8x64xf32> to vector<8x16xf32>
    %489 = vector.extract_strided_slice %486 {offsets = [0, 48], sizes = [8, 16], strides = [1, 1]} : vector<8x64xf32> to vector<8x16xf32>
    %490 = vector.extract_strided_slice %481 {offsets = [0, 32], sizes = [8, 16], strides = [1, 1]} : vector<8x64xf32> to vector<8x16xf32>
    %491 = math.tanh %490 : vector<8x16xf32>
    %492 = arith.mulf %488, %407 : vector<8x16xf32>
    %493 = arith.mulf %487, %491 : vector<8x16xf32>
    %494 = arith.addf %492, %493 : vector<8x16xf32>
    %495 = math.tanh %494 : vector<8x16xf32>
    %496 = arith.mulf %489, %495 : vector<8x16xf32>
    %497 = vector.extract_strided_slice %0 {offsets = [0, 10], sizes = [8, 1], strides = [1, 1]} : vector<8x16xf32> to vector<8x1xf32>
    %498 = vector.broadcast %497 : vector<8x1xf32> to vector<8x64xf32>
    %499 = arith.mulf %498, %6 : vector<8x64xf32>
    %500 = arith.addf %59, %499 : vector<8x64xf32>
    %501 = vector.extract_strided_slice %0 {offsets = [0, 11], sizes = [8, 1], strides = [1, 1]} : vector<8x16xf32> to vector<8x1xf32>
    %502 = vector.broadcast %501 : vector<8x1xf32> to vector<8x64xf32>
    %503 = arith.mulf %502, %9 : vector<8x64xf32>
    %504 = arith.addf %500, %503 : vector<8x64xf32>
    %505 = vector.extract_strided_slice %496 {offsets = [0, 0], sizes = [8, 1], strides = [1, 1]} : vector<8x16xf32> to vector<8x1xf32>
    %506 = vector.broadcast %505 : vector<8x1xf32> to vector<8x64xf32>
    %507 = arith.mulf %506, %12 : vector<8x64xf32>
    %508 = arith.addf %504, %507 : vector<8x64xf32>
    %509 = vector.extract_strided_slice %496 {offsets = [0, 1], sizes = [8, 1], strides = [1, 1]} : vector<8x16xf32> to vector<8x1xf32>
    %510 = vector.broadcast %509 : vector<8x1xf32> to vector<8x64xf32>
    %511 = arith.mulf %510, %15 : vector<8x64xf32>
    %512 = arith.addf %508, %511 : vector<8x64xf32>
    %513 = vector.extract_strided_slice %496 {offsets = [0, 2], sizes = [8, 1], strides = [1, 1]} : vector<8x16xf32> to vector<8x1xf32>
    %514 = vector.broadcast %513 : vector<8x1xf32> to vector<8x64xf32>
    %515 = arith.mulf %514, %18 : vector<8x64xf32>
    %516 = arith.addf %512, %515 : vector<8x64xf32>
    %517 = vector.extract_strided_slice %496 {offsets = [0, 3], sizes = [8, 1], strides = [1, 1]} : vector<8x16xf32> to vector<8x1xf32>
    %518 = vector.broadcast %517 : vector<8x1xf32> to vector<8x64xf32>
    %519 = arith.mulf %518, %21 : vector<8x64xf32>
    %520 = arith.addf %516, %519 : vector<8x64xf32>
    %521 = vector.extract_strided_slice %496 {offsets = [0, 4], sizes = [8, 1], strides = [1, 1]} : vector<8x16xf32> to vector<8x1xf32>
    %522 = vector.broadcast %521 : vector<8x1xf32> to vector<8x64xf32>
    %523 = arith.mulf %522, %24 : vector<8x64xf32>
    %524 = arith.addf %520, %523 : vector<8x64xf32>
    %525 = vector.extract_strided_slice %496 {offsets = [0, 5], sizes = [8, 1], strides = [1, 1]} : vector<8x16xf32> to vector<8x1xf32>
    %526 = vector.broadcast %525 : vector<8x1xf32> to vector<8x64xf32>
    %527 = arith.mulf %526, %27 : vector<8x64xf32>
    %528 = arith.addf %524, %527 : vector<8x64xf32>
    %529 = vector.extract_strided_slice %496 {offsets = [0, 6], sizes = [8, 1], strides = [1, 1]} : vector<8x16xf32> to vector<8x1xf32>
    %530 = vector.broadcast %529 : vector<8x1xf32> to vector<8x64xf32>
    %531 = arith.mulf %530, %30 : vector<8x64xf32>
    %532 = arith.addf %528, %531 : vector<8x64xf32>
    %533 = vector.extract_strided_slice %496 {offsets = [0, 7], sizes = [8, 1], strides = [1, 1]} : vector<8x16xf32> to vector<8x1xf32>
    %534 = vector.broadcast %533 : vector<8x1xf32> to vector<8x64xf32>
    %535 = arith.mulf %534, %33 : vector<8x64xf32>
    %536 = arith.addf %532, %535 : vector<8x64xf32>
    %537 = vector.extract_strided_slice %496 {offsets = [0, 8], sizes = [8, 1], strides = [1, 1]} : vector<8x16xf32> to vector<8x1xf32>
    %538 = vector.broadcast %537 : vector<8x1xf32> to vector<8x64xf32>
    %539 = arith.mulf %538, %36 : vector<8x64xf32>
    %540 = arith.addf %536, %539 : vector<8x64xf32>
    %541 = vector.extract_strided_slice %496 {offsets = [0, 9], sizes = [8, 1], strides = [1, 1]} : vector<8x16xf32> to vector<8x1xf32>
    %542 = vector.broadcast %541 : vector<8x1xf32> to vector<8x64xf32>
    %543 = arith.mulf %542, %39 : vector<8x64xf32>
    %544 = arith.addf %540, %543 : vector<8x64xf32>
    %545 = vector.extract_strided_slice %496 {offsets = [0, 10], sizes = [8, 1], strides = [1, 1]} : vector<8x16xf32> to vector<8x1xf32>
    %546 = vector.broadcast %545 : vector<8x1xf32> to vector<8x64xf32>
    %547 = arith.mulf %546, %42 : vector<8x64xf32>
    %548 = arith.addf %544, %547 : vector<8x64xf32>
    %549 = vector.extract_strided_slice %496 {offsets = [0, 11], sizes = [8, 1], strides = [1, 1]} : vector<8x16xf32> to vector<8x1xf32>
    %550 = vector.broadcast %549 : vector<8x1xf32> to vector<8x64xf32>
    %551 = arith.mulf %550, %45 : vector<8x64xf32>
    %552 = arith.addf %548, %551 : vector<8x64xf32>
    %553 = vector.extract_strided_slice %496 {offsets = [0, 12], sizes = [8, 1], strides = [1, 1]} : vector<8x16xf32> to vector<8x1xf32>
    %554 = vector.broadcast %553 : vector<8x1xf32> to vector<8x64xf32>
    %555 = arith.mulf %554, %48 : vector<8x64xf32>
    %556 = arith.addf %552, %555 : vector<8x64xf32>
    %557 = vector.extract_strided_slice %496 {offsets = [0, 13], sizes = [8, 1], strides = [1, 1]} : vector<8x16xf32> to vector<8x1xf32>
    %558 = vector.broadcast %557 : vector<8x1xf32> to vector<8x64xf32>
    %559 = arith.mulf %558, %51 : vector<8x64xf32>
    %560 = arith.addf %556, %559 : vector<8x64xf32>
    %561 = vector.extract_strided_slice %496 {offsets = [0, 14], sizes = [8, 1], strides = [1, 1]} : vector<8x16xf32> to vector<8x1xf32>
    %562 = vector.broadcast %561 : vector<8x1xf32> to vector<8x64xf32>
    %563 = arith.mulf %562, %54 : vector<8x64xf32>
    %564 = arith.addf %560, %563 : vector<8x64xf32>
    %565 = vector.extract_strided_slice %496 {offsets = [0, 15], sizes = [8, 1], strides = [1, 1]} : vector<8x16xf32> to vector<8x1xf32>
    %566 = vector.broadcast %565 : vector<8x1xf32> to vector<8x64xf32>
    %567 = arith.mulf %566, %57 : vector<8x64xf32>
    %568 = arith.addf %564, %567 : vector<8x64xf32>
    %569 = arith.negf %568 : vector<8x64xf32>
    %570 = math.exp %569 : vector<8x64xf32>
    %cst_11 = arith.constant 1.000000e+00 : f32
    %571 = vector.broadcast %cst_11 : f32 to vector<8x64xf32>
    %572 = arith.addf %571, %570 : vector<8x64xf32>
    %573 = arith.divf %571, %572 : vector<8x64xf32>
    %574 = vector.extract_strided_slice %573 {offsets = [0, 0], sizes = [8, 16], strides = [1, 1]} : vector<8x64xf32> to vector<8x16xf32>
    %575 = vector.extract_strided_slice %573 {offsets = [0, 16], sizes = [8, 16], strides = [1, 1]} : vector<8x64xf32> to vector<8x16xf32>
    %576 = vector.extract_strided_slice %573 {offsets = [0, 48], sizes = [8, 16], strides = [1, 1]} : vector<8x64xf32> to vector<8x16xf32>
    %577 = vector.extract_strided_slice %568 {offsets = [0, 32], sizes = [8, 16], strides = [1, 1]} : vector<8x64xf32> to vector<8x16xf32>
    %578 = math.tanh %577 : vector<8x16xf32>
    %579 = arith.mulf %575, %494 : vector<8x16xf32>
    %580 = arith.mulf %574, %578 : vector<8x16xf32>
    %581 = arith.addf %579, %580 : vector<8x16xf32>
    %582 = math.tanh %581 : vector<8x16xf32>
    %583 = arith.mulf %576, %582 : vector<8x16xf32>
    %584 = vector.extract_strided_slice %0 {offsets = [0, 12], sizes = [8, 1], strides = [1, 1]} : vector<8x16xf32> to vector<8x1xf32>
    %585 = vector.broadcast %584 : vector<8x1xf32> to vector<8x64xf32>
    %586 = arith.mulf %585, %6 : vector<8x64xf32>
    %587 = arith.addf %59, %586 : vector<8x64xf32>
    %588 = vector.extract_strided_slice %0 {offsets = [0, 13], sizes = [8, 1], strides = [1, 1]} : vector<8x16xf32> to vector<8x1xf32>
    %589 = vector.broadcast %588 : vector<8x1xf32> to vector<8x64xf32>
    %590 = arith.mulf %589, %9 : vector<8x64xf32>
    %591 = arith.addf %587, %590 : vector<8x64xf32>
    %592 = vector.extract_strided_slice %583 {offsets = [0, 0], sizes = [8, 1], strides = [1, 1]} : vector<8x16xf32> to vector<8x1xf32>
    %593 = vector.broadcast %592 : vector<8x1xf32> to vector<8x64xf32>
    %594 = arith.mulf %593, %12 : vector<8x64xf32>
    %595 = arith.addf %591, %594 : vector<8x64xf32>
    %596 = vector.extract_strided_slice %583 {offsets = [0, 1], sizes = [8, 1], strides = [1, 1]} : vector<8x16xf32> to vector<8x1xf32>
    %597 = vector.broadcast %596 : vector<8x1xf32> to vector<8x64xf32>
    %598 = arith.mulf %597, %15 : vector<8x64xf32>
    %599 = arith.addf %595, %598 : vector<8x64xf32>
    %600 = vector.extract_strided_slice %583 {offsets = [0, 2], sizes = [8, 1], strides = [1, 1]} : vector<8x16xf32> to vector<8x1xf32>
    %601 = vector.broadcast %600 : vector<8x1xf32> to vector<8x64xf32>
    %602 = arith.mulf %601, %18 : vector<8x64xf32>
    %603 = arith.addf %599, %602 : vector<8x64xf32>
    %604 = vector.extract_strided_slice %583 {offsets = [0, 3], sizes = [8, 1], strides = [1, 1]} : vector<8x16xf32> to vector<8x1xf32>
    %605 = vector.broadcast %604 : vector<8x1xf32> to vector<8x64xf32>
    %606 = arith.mulf %605, %21 : vector<8x64xf32>
    %607 = arith.addf %603, %606 : vector<8x64xf32>
    %608 = vector.extract_strided_slice %583 {offsets = [0, 4], sizes = [8, 1], strides = [1, 1]} : vector<8x16xf32> to vector<8x1xf32>
    %609 = vector.broadcast %608 : vector<8x1xf32> to vector<8x64xf32>
    %610 = arith.mulf %609, %24 : vector<8x64xf32>
    %611 = arith.addf %607, %610 : vector<8x64xf32>
    %612 = vector.extract_strided_slice %583 {offsets = [0, 5], sizes = [8, 1], strides = [1, 1]} : vector<8x16xf32> to vector<8x1xf32>
    %613 = vector.broadcast %612 : vector<8x1xf32> to vector<8x64xf32>
    %614 = arith.mulf %613, %27 : vector<8x64xf32>
    %615 = arith.addf %611, %614 : vector<8x64xf32>
    %616 = vector.extract_strided_slice %583 {offsets = [0, 6], sizes = [8, 1], strides = [1, 1]} : vector<8x16xf32> to vector<8x1xf32>
    %617 = vector.broadcast %616 : vector<8x1xf32> to vector<8x64xf32>
    %618 = arith.mulf %617, %30 : vector<8x64xf32>
    %619 = arith.addf %615, %618 : vector<8x64xf32>
    %620 = vector.extract_strided_slice %583 {offsets = [0, 7], sizes = [8, 1], strides = [1, 1]} : vector<8x16xf32> to vector<8x1xf32>
    %621 = vector.broadcast %620 : vector<8x1xf32> to vector<8x64xf32>
    %622 = arith.mulf %621, %33 : vector<8x64xf32>
    %623 = arith.addf %619, %622 : vector<8x64xf32>
    %624 = vector.extract_strided_slice %583 {offsets = [0, 8], sizes = [8, 1], strides = [1, 1]} : vector<8x16xf32> to vector<8x1xf32>
    %625 = vector.broadcast %624 : vector<8x1xf32> to vector<8x64xf32>
    %626 = arith.mulf %625, %36 : vector<8x64xf32>
    %627 = arith.addf %623, %626 : vector<8x64xf32>
    %628 = vector.extract_strided_slice %583 {offsets = [0, 9], sizes = [8, 1], strides = [1, 1]} : vector<8x16xf32> to vector<8x1xf32>
    %629 = vector.broadcast %628 : vector<8x1xf32> to vector<8x64xf32>
    %630 = arith.mulf %629, %39 : vector<8x64xf32>
    %631 = arith.addf %627, %630 : vector<8x64xf32>
    %632 = vector.extract_strided_slice %583 {offsets = [0, 10], sizes = [8, 1], strides = [1, 1]} : vector<8x16xf32> to vector<8x1xf32>
    %633 = vector.broadcast %632 : vector<8x1xf32> to vector<8x64xf32>
    %634 = arith.mulf %633, %42 : vector<8x64xf32>
    %635 = arith.addf %631, %634 : vector<8x64xf32>
    %636 = vector.extract_strided_slice %583 {offsets = [0, 11], sizes = [8, 1], strides = [1, 1]} : vector<8x16xf32> to vector<8x1xf32>
    %637 = vector.broadcast %636 : vector<8x1xf32> to vector<8x64xf32>
    %638 = arith.mulf %637, %45 : vector<8x64xf32>
    %639 = arith.addf %635, %638 : vector<8x64xf32>
    %640 = vector.extract_strided_slice %583 {offsets = [0, 12], sizes = [8, 1], strides = [1, 1]} : vector<8x16xf32> to vector<8x1xf32>
    %641 = vector.broadcast %640 : vector<8x1xf32> to vector<8x64xf32>
    %642 = arith.mulf %641, %48 : vector<8x64xf32>
    %643 = arith.addf %639, %642 : vector<8x64xf32>
    %644 = vector.extract_strided_slice %583 {offsets = [0, 13], sizes = [8, 1], strides = [1, 1]} : vector<8x16xf32> to vector<8x1xf32>
    %645 = vector.broadcast %644 : vector<8x1xf32> to vector<8x64xf32>
    %646 = arith.mulf %645, %51 : vector<8x64xf32>
    %647 = arith.addf %643, %646 : vector<8x64xf32>
    %648 = vector.extract_strided_slice %583 {offsets = [0, 14], sizes = [8, 1], strides = [1, 1]} : vector<8x16xf32> to vector<8x1xf32>
    %649 = vector.broadcast %648 : vector<8x1xf32> to vector<8x64xf32>
    %650 = arith.mulf %649, %54 : vector<8x64xf32>
    %651 = arith.addf %647, %650 : vector<8x64xf32>
    %652 = vector.extract_strided_slice %583 {offsets = [0, 15], sizes = [8, 1], strides = [1, 1]} : vector<8x16xf32> to vector<8x1xf32>
    %653 = vector.broadcast %652 : vector<8x1xf32> to vector<8x64xf32>
    %654 = arith.mulf %653, %57 : vector<8x64xf32>
    %655 = arith.addf %651, %654 : vector<8x64xf32>
    %656 = arith.negf %655 : vector<8x64xf32>
    %657 = math.exp %656 : vector<8x64xf32>
    %cst_12 = arith.constant 1.000000e+00 : f32
    %658 = vector.broadcast %cst_12 : f32 to vector<8x64xf32>
    %659 = arith.addf %658, %657 : vector<8x64xf32>
    %660 = arith.divf %658, %659 : vector<8x64xf32>
    %661 = vector.extract_strided_slice %660 {offsets = [0, 0], sizes = [8, 16], strides = [1, 1]} : vector<8x64xf32> to vector<8x16xf32>
    %662 = vector.extract_strided_slice %660 {offsets = [0, 16], sizes = [8, 16], strides = [1, 1]} : vector<8x64xf32> to vector<8x16xf32>
    %663 = vector.extract_strided_slice %660 {offsets = [0, 48], sizes = [8, 16], strides = [1, 1]} : vector<8x64xf32> to vector<8x16xf32>
    %664 = vector.extract_strided_slice %655 {offsets = [0, 32], sizes = [8, 16], strides = [1, 1]} : vector<8x64xf32> to vector<8x16xf32>
    %665 = math.tanh %664 : vector<8x16xf32>
    %666 = arith.mulf %662, %581 : vector<8x16xf32>
    %667 = arith.mulf %661, %665 : vector<8x16xf32>
    %668 = arith.addf %666, %667 : vector<8x16xf32>
    %669 = math.tanh %668 : vector<8x16xf32>
    %670 = arith.mulf %663, %669 : vector<8x16xf32>
    %671 = vector.extract_strided_slice %0 {offsets = [0, 14], sizes = [8, 1], strides = [1, 1]} : vector<8x16xf32> to vector<8x1xf32>
    %672 = vector.broadcast %671 : vector<8x1xf32> to vector<8x64xf32>
    %673 = arith.mulf %672, %6 : vector<8x64xf32>
    %674 = arith.addf %59, %673 : vector<8x64xf32>
    %675 = vector.extract_strided_slice %0 {offsets = [0, 15], sizes = [8, 1], strides = [1, 1]} : vector<8x16xf32> to vector<8x1xf32>
    %676 = vector.broadcast %675 : vector<8x1xf32> to vector<8x64xf32>
    %677 = arith.mulf %676, %9 : vector<8x64xf32>
    %678 = arith.addf %674, %677 : vector<8x64xf32>
    %679 = vector.extract_strided_slice %670 {offsets = [0, 0], sizes = [8, 1], strides = [1, 1]} : vector<8x16xf32> to vector<8x1xf32>
    %680 = vector.broadcast %679 : vector<8x1xf32> to vector<8x64xf32>
    %681 = arith.mulf %680, %12 : vector<8x64xf32>
    %682 = arith.addf %678, %681 : vector<8x64xf32>
    %683 = vector.extract_strided_slice %670 {offsets = [0, 1], sizes = [8, 1], strides = [1, 1]} : vector<8x16xf32> to vector<8x1xf32>
    %684 = vector.broadcast %683 : vector<8x1xf32> to vector<8x64xf32>
    %685 = arith.mulf %684, %15 : vector<8x64xf32>
    %686 = arith.addf %682, %685 : vector<8x64xf32>
    %687 = vector.extract_strided_slice %670 {offsets = [0, 2], sizes = [8, 1], strides = [1, 1]} : vector<8x16xf32> to vector<8x1xf32>
    %688 = vector.broadcast %687 : vector<8x1xf32> to vector<8x64xf32>
    %689 = arith.mulf %688, %18 : vector<8x64xf32>
    %690 = arith.addf %686, %689 : vector<8x64xf32>
    %691 = vector.extract_strided_slice %670 {offsets = [0, 3], sizes = [8, 1], strides = [1, 1]} : vector<8x16xf32> to vector<8x1xf32>
    %692 = vector.broadcast %691 : vector<8x1xf32> to vector<8x64xf32>
    %693 = arith.mulf %692, %21 : vector<8x64xf32>
    %694 = arith.addf %690, %693 : vector<8x64xf32>
    %695 = vector.extract_strided_slice %670 {offsets = [0, 4], sizes = [8, 1], strides = [1, 1]} : vector<8x16xf32> to vector<8x1xf32>
    %696 = vector.broadcast %695 : vector<8x1xf32> to vector<8x64xf32>
    %697 = arith.mulf %696, %24 : vector<8x64xf32>
    %698 = arith.addf %694, %697 : vector<8x64xf32>
    %699 = vector.extract_strided_slice %670 {offsets = [0, 5], sizes = [8, 1], strides = [1, 1]} : vector<8x16xf32> to vector<8x1xf32>
    %700 = vector.broadcast %699 : vector<8x1xf32> to vector<8x64xf32>
    %701 = arith.mulf %700, %27 : vector<8x64xf32>
    %702 = arith.addf %698, %701 : vector<8x64xf32>
    %703 = vector.extract_strided_slice %670 {offsets = [0, 6], sizes = [8, 1], strides = [1, 1]} : vector<8x16xf32> to vector<8x1xf32>
    %704 = vector.broadcast %703 : vector<8x1xf32> to vector<8x64xf32>
    %705 = arith.mulf %704, %30 : vector<8x64xf32>
    %706 = arith.addf %702, %705 : vector<8x64xf32>
    %707 = vector.extract_strided_slice %670 {offsets = [0, 7], sizes = [8, 1], strides = [1, 1]} : vector<8x16xf32> to vector<8x1xf32>
    %708 = vector.broadcast %707 : vector<8x1xf32> to vector<8x64xf32>
    %709 = arith.mulf %708, %33 : vector<8x64xf32>
    %710 = arith.addf %706, %709 : vector<8x64xf32>
    %711 = vector.extract_strided_slice %670 {offsets = [0, 8], sizes = [8, 1], strides = [1, 1]} : vector<8x16xf32> to vector<8x1xf32>
    %712 = vector.broadcast %711 : vector<8x1xf32> to vector<8x64xf32>
    %713 = arith.mulf %712, %36 : vector<8x64xf32>
    %714 = arith.addf %710, %713 : vector<8x64xf32>
    %715 = vector.extract_strided_slice %670 {offsets = [0, 9], sizes = [8, 1], strides = [1, 1]} : vector<8x16xf32> to vector<8x1xf32>
    %716 = vector.broadcast %715 : vector<8x1xf32> to vector<8x64xf32>
    %717 = arith.mulf %716, %39 : vector<8x64xf32>
    %718 = arith.addf %714, %717 : vector<8x64xf32>
    %719 = vector.extract_strided_slice %670 {offsets = [0, 10], sizes = [8, 1], strides = [1, 1]} : vector<8x16xf32> to vector<8x1xf32>
    %720 = vector.broadcast %719 : vector<8x1xf32> to vector<8x64xf32>
    %721 = arith.mulf %720, %42 : vector<8x64xf32>
    %722 = arith.addf %718, %721 : vector<8x64xf32>
    %723 = vector.extract_strided_slice %670 {offsets = [0, 11], sizes = [8, 1], strides = [1, 1]} : vector<8x16xf32> to vector<8x1xf32>
    %724 = vector.broadcast %723 : vector<8x1xf32> to vector<8x64xf32>
    %725 = arith.mulf %724, %45 : vector<8x64xf32>
    %726 = arith.addf %722, %725 : vector<8x64xf32>
    %727 = vector.extract_strided_slice %670 {offsets = [0, 12], sizes = [8, 1], strides = [1, 1]} : vector<8x16xf32> to vector<8x1xf32>
    %728 = vector.broadcast %727 : vector<8x1xf32> to vector<8x64xf32>
    %729 = arith.mulf %728, %48 : vector<8x64xf32>
    %730 = arith.addf %726, %729 : vector<8x64xf32>
    %731 = vector.extract_strided_slice %670 {offsets = [0, 13], sizes = [8, 1], strides = [1, 1]} : vector<8x16xf32> to vector<8x1xf32>
    %732 = vector.broadcast %731 : vector<8x1xf32> to vector<8x64xf32>
    %733 = arith.mulf %732, %51 : vector<8x64xf32>
    %734 = arith.addf %730, %733 : vector<8x64xf32>
    %735 = vector.extract_strided_slice %670 {offsets = [0, 14], sizes = [8, 1], strides = [1, 1]} : vector<8x16xf32> to vector<8x1xf32>
    %736 = vector.broadcast %735 : vector<8x1xf32> to vector<8x64xf32>
    %737 = arith.mulf %736, %54 : vector<8x64xf32>
    %738 = arith.addf %734, %737 : vector<8x64xf32>
    %739 = vector.extract_strided_slice %670 {offsets = [0, 15], sizes = [8, 1], strides = [1, 1]} : vector<8x16xf32> to vector<8x1xf32>
    %740 = vector.broadcast %739 : vector<8x1xf32> to vector<8x64xf32>
    %741 = arith.mulf %740, %57 : vector<8x64xf32>
    %742 = arith.addf %738, %741 : vector<8x64xf32>
    %743 = arith.negf %742 : vector<8x64xf32>
    %744 = math.exp %743 : vector<8x64xf32>
    %cst_13 = arith.constant 1.000000e+00 : f32
    %745 = vector.broadcast %cst_13 : f32 to vector<8x64xf32>
    %746 = arith.addf %745, %744 : vector<8x64xf32>
    %747 = arith.divf %745, %746 : vector<8x64xf32>
    %748 = vector.extract_strided_slice %747 {offsets = [0, 0], sizes = [8, 16], strides = [1, 1]} : vector<8x64xf32> to vector<8x16xf32>
    %749 = vector.extract_strided_slice %747 {offsets = [0, 16], sizes = [8, 16], strides = [1, 1]} : vector<8x64xf32> to vector<8x16xf32>
    %750 = vector.extract_strided_slice %747 {offsets = [0, 48], sizes = [8, 16], strides = [1, 1]} : vector<8x64xf32> to vector<8x16xf32>
    %751 = vector.extract_strided_slice %742 {offsets = [0, 32], sizes = [8, 16], strides = [1, 1]} : vector<8x64xf32> to vector<8x16xf32>
    %752 = math.tanh %751 : vector<8x16xf32>
    %753 = arith.mulf %749, %668 : vector<8x16xf32>
    %754 = arith.mulf %748, %752 : vector<8x16xf32>
    %755 = arith.addf %753, %754 : vector<8x16xf32>
    %756 = math.tanh %755 : vector<8x16xf32>
    %757 = arith.mulf %750, %756 : vector<8x16xf32>
    %c32 = arith.constant 32 : index
    %c0_14 = arith.constant 0 : index
    %758 = vector.load %arg1[%c32, %c0_14] : memref<80x64xf32, #tpu.memory_space<vmem>>, vector<16x16xf32>
    %c48 = arith.constant 48 : index
    %c0_15 = arith.constant 0 : index
    %759 = vector.load %arg1[%c48, %c0_15] : memref<80x64xf32, #tpu.memory_space<vmem>>, vector<1x16xf32>
    %cst_16 = arith.constant dense<0.000000e+00> : vector<8x16xf32>
    %760 = tpu.matmul %757, %758, %cst_16 {dimension_numbers = #tpu.dot_dimension_numbers<[1], [0], [0], [1], [0, 0, 1, 1], [], []>} : vector<8x16xf32>, vector<16x16xf32>, vector<8x16xf32> -> vector<8x16xf32>
    %761 = vector.broadcast %759 : vector<1x16xf32> to vector<8x16xf32>
    %762 = arith.addf %760, %761 : vector<8x16xf32>
    %cst_17 = arith.constant 0.000000e+00 : f32
    %763 = vector.broadcast %cst_17 : f32 to vector<8x16xf32>
    %764 = arith.maximumf %762, %763 : vector<8x16xf32>
    %c56 = arith.constant 56 : index
    %c0_18 = arith.constant 0 : index
    %765 = vector.load %arg1[%c56, %c0_18] : memref<80x64xf32, #tpu.memory_space<vmem>>, vector<16x2xf32>
    %c72 = arith.constant 72 : index
    %c0_19 = arith.constant 0 : index
    %766 = vector.load %arg1[%c72, %c0_19] : memref<80x64xf32, #tpu.memory_space<vmem>>, vector<1x2xf32>
    %cst_20 = arith.constant dense<0.000000e+00> : vector<8x2xf32>
    %767 = tpu.matmul %764, %765, %cst_20 {dimension_numbers = #tpu.dot_dimension_numbers<[1], [0], [0], [1], [0, 0, 1, 1], [], []>} : vector<8x16xf32>, vector<16x2xf32>, vector<8x2xf32> -> vector<8x2xf32>
    %768 = vector.broadcast %766 : vector<1x2xf32> to vector<8x2xf32>
    %769 = arith.addf %767, %768 : vector<8x2xf32>
    %cst_21 = arith.constant dense<0xFF800000> : vector<8xf32>
    %770 = vector.multi_reduction <maximumf>, %769, %cst_21 [1] : vector<8x2xf32> to vector<8xf32>
    %771 = vector.shape_cast %770 : vector<8xf32> to vector<8x1xf32>
    %772 = vector.broadcast %771 : vector<8x1xf32> to vector<8x2xf32>
    %773 = arith.subf %769, %772 : vector<8x2xf32>
    %774 = math.exp %773 : vector<8x2xf32>
    %cst_22 = arith.constant dense<0.000000e+00> : vector<8xf32>
    %775 = vector.multi_reduction <add>, %774, %cst_22 [1] : vector<8x2xf32> to vector<8xf32>
    %776 = vector.shape_cast %775 : vector<8xf32> to vector<8x1xf32>
    %777 = tpu.reciprocal %776 {approx = true} : vector<8x1xf32> -> vector<8x1xf32>
    %778 = vector.broadcast %777 : vector<8x1xf32> to vector<8x2xf32>
    %779 = arith.mulf %774, %778 : vector<8x2xf32>
    %c0_23 = arith.constant 0 : index
    %c0_24 = arith.constant 0 : index
    %780 = vector.load %arg2[%c0_23, %c0_24] : memref<8x2xf32, #tpu.memory_space<vmem>>, vector<8x2xf32>
    tpu.vector_store %arg2[%c0_23, %c0_24], %779 {strides = array<i32>} : memref<8x2xf32, #tpu.memory_space<vmem>>, vector<8x2xf32>,
    return
  }
}

</mosaic_0001>

<llo_original>
// kernel: policy_forward.1
$region0: #{policy_forward.1}
  #allocation0 [shape = 'u32[]', space=smem, size = 0x4, offset = 0x4, fixed_abs, tag = 'smem constant byte address 0x4 - core index']
  #allocation1 [shape = 'u32[72,128]{1,0:T(1,128)}', space=vmem, size = 0x9000, scoped, tag = 'internal scratch']
  %s0 = inlined_call_operand.vmem [shape: f32[8,16], index: 0, kind: input, shape index: {}]
  %s1 = inlined_call_operand.vmem [shape: f32[80,64], index: 1, kind: input, shape index: {}]
  %s2 = inlined_call_operand.vmem [shape: f32[8,2], index: 2, kind: output, shape index: {}]
  %s3 = sld [smem:[#allocation0]]
  $region18: #{policy_forward.1} parent=0
    _
  %s5 = ssub.s32 1, %s3
  %s6 = scalar_select 0, %s5, %s3
  // Predicated region
  $region2: #{policy_forward.1} parent=0 // pred_check
    _
  $region3: #{policy_forward.1} parent=0 // pred_check_branch
    %8 = sbr.rel (0) target = $region5
  $region4: #{policy_forward.1} parent=0 // pred_region
    _
  $region5: #{policy_forward.1} parent=0 // pred_fallthru
    _
  // Predicated region
  $region6: #{policy_forward.1} parent=0 // pred_check
    _
  $region7: #{policy_forward.1} parent=0 // pred_check_branch
    %10 = sbr.rel (0) target = $region9
  $region8: #{policy_forward.1} parent=0 // pred_region
    _
  $region9: #{policy_forward.1} parent=0 // pred_fallthru
    _
  %v11 = vld [vmem:[%s0] sm:$0xff]
  %v12 = vld [vmem:[%s1] sm:$0x3]
  %v13 = vld [vmem:[%s1 + $0x8] sm:$0xff]
  %v14 = vld [vmem:[%s1 + $0x10] sm:$0xff]
  %v15 = vld [vmem:[%s1 + $0x18] sm:$0x1]
  %v16 = vperm.slane %v12, 0
  %v17 = vperm.slane %v12, 1
  %v18 = vperm.slane %v13, 0
  %v19 = vperm.slane %v13, 1
  %v20 = vperm.slane %v13, 2
  %v21 = vperm.slane %v13, 3
  %v22 = vperm.slane %v13, 4
  %v23 = vperm.slane %v13, 5
  %v24 = vperm.slane %v13, 6
  %v25 = vperm.slane %v13, 7
  %v26 = vperm.slane %v14, 0
  %v27 = vperm.slane %v14, 1
  %v28 = vperm.slane %v14, 2
  %v29 = vperm.slane %v14, 3
  %v30 = vperm.slane %v14, 4
  %v31 = vperm.slane %v14, 5
  %v32 = vperm.slane %v14, 6
  %v33 = vperm.slane %v14, 7
  %v34 = vperm.slane %v15, 0
  %36 = vset.pattern.permute.xlu0 0
  %37 = vperm.xlu0 %36, %v11
  %v38 = vpop.permute.xlu0 %37
  %v40 = vmul.f32 %v38, %v16
  %v41 = vadd.f32 %v34, %v40
  %42 = vset.pattern.permute.xlu0 1
  %43 = vperm.xlu0 %42, %v11
  %v44 = vpop.permute.xlu0 %43
  %v46 = vmul.f32 %v44, %v17
  %v47 = vadd.f32 %v41, %v46
  %v48 = vmul.f32 %v18, 0.0
  %v49 = vadd.f32 %v47, %v48
  %v50 = vmul.f32 %v19, 0.0
  %v51 = vadd.f32 %v49, %v50
  %v52 = vmul.f32 %v20, 0.0
  %v53 = vadd.f32 %v51, %v52
  %v54 = vmul.f32 %v21, 0.0
  %v55 = vadd.f32 %v53, %v54
  %v56 = vmul.f32 %v22, 0.0
  %v57 = vadd.f32 %v55, %v56
  %v58 = vmul.f32 %v23, 0.0
  %v59 = vadd.f32 %v57, %v58
  %v60 = vmul.f32 %v24, 0.0
  %v61 = vadd.f32 %v59, %v60
  %v62 = vmul.f32 %v25, 0.0
  %v63 = vadd.f32 %v61, %v62
  %v64 = vmul.f32 %v26, 0.0
  %v65 = vadd.f32 %v63, %v64
  %v66 = vmul.f32 %v27, 0.0
  %v67 = vadd.f32 %v65, %v66
  %v68 = vmul.f32 %v28, 0.0
  %v69 = vadd.f32 %v67, %v68
  %v70 = vmul.f32 %v29, 0.0
  %v71 = vadd.f32 %v69, %v70
  %v72 = vmul.f32 %v30, 0.0
  %v73 = vadd.f32 %v71, %v72
  %v74 = vmul.f32 %v31, 0.0
  %v75 = vadd.f32 %v73, %v74
  %v76 = vmul.f32 %v32, 0.0
  %v77 = vadd.f32 %v75, %v76
  %v78 = vmul.f32 %v33, 0.0
  %v79 = vadd.f32 %v77, %v78
  %v80 = vxor.u32 %v79, 2147483648
  %v81 = vmul.f32 %v80, 1.442695
  %v82 = vpow.pop %v81
  %v83 = vadd.f32 %v82, 1.0
  %v84 = vrcp.pop %v83
  %v85 = vmul.f32 %v83, %v84
  %v86 = vsub.f32 1.0, %v85
  %v87 = vmul.f32 %v84, %v86
  %v88 = vadd.f32 %v84, %v87
  %vm89 = vweird.f32 %v83
  %vm90 = vweird.f32 %v84
  %vm91 = vmor %vm89, %vm90
  %v92 = vsel %vm91, %v84, %v88
  %v93 = vand.u32 2147483647, %v83
  %vm94 = vcmp.eq.f32.partialorder %v93, 8.507059e+37
  %v95 = vand.u32 %v83, 2147483648
  %v96 = vor.u32 1.1754944e-38, %v95
  %v97 = vsel %vm94, %v96, %v92
  %v98 = vmul.f32 1.0, %v97
  %v99 = vtanh.pop %v79
  %v100 = vmul.f32 %v98, 0.0
  %102 = vrot.lane.b32.xlu0 %v99, 96
  %v103 = vpop.permute.xlu0 %102
  %v105 = vmul.f32 %v98, %v103
  %107 = vrot.lane.b32.xlu0 %v105, 16
  %v108 = vpop.permute.xlu0 %107
  %v110 = vadd.f32 %v100, %v108
  %v111 = vtanh.pop %v110
  %113 = vrot.lane.b32.xlu0 %v111, 32
  %v114 = vpop.permute.xlu0 %113
  %v116 = vmul.f32 %v98, %v114
  %117 = vset.pattern.permute.xlu0 2
  %118 = vperm.xlu0 %117, %v11
  %v119 = vpop.permute.xlu0 %118
  %v121 = vmul.f32 %v119, %v16
  %v122 = vadd.f32 %v34, %v121
  %123 = vset.pattern.permute.xlu0 3
  %124 = vperm.xlu0 %123, %v11
  %v125 = vpop.permute.xlu0 %124
  %v127 = vmul.f32 %v125, %v17
  %v128 = vadd.f32 %v122, %v127
  %130 = vset.pattern.permute.xlu0 48
  %131 = vperm.xlu0 %130, %v116
  %v132 = vpop.permute.xlu0 %131
  %v134 = vmul.f32 %v132, %v18
  %v135 = vadd.f32 %v128, %v134
  %136 = vset.pattern.permute.xlu0 49
  %137 = vperm.xlu0 %136, %v116
  %v138 = vpop.permute.xlu0 %137
  %v140 = vmul.f32 %v138, %v19
  %v141 = vadd.f32 %v135, %v140
  %142 = vset.pattern.permute.xlu0 50
  %143 = vperm.xlu0 %142, %v116
  %v144 = vpop.permute.xlu0 %143
  %v146 = vmul.f32 %v144, %v20
  %v147 = vadd.f32 %v141, %v146
  %148 = vset.pattern.permute.xlu0 51
  %149 = vperm.xlu0 %148, %v116
  %v150 = vpop.permute.xlu0 %149
  %v152 = vmul.f32 %v150, %v21
  %v153 = vadd.f32 %v147, %v152
  %154 = vset.pattern.permute.xlu0 52
  %155 = vperm.xlu0 %154, %v116
  %v156 = vpop.permute.xlu0 %155
  %v158 = vmul.f32 %v156, %v22
  %v159 = vadd.f32 %v153, %v158
  %160 = vset.pattern.permute.xlu0 53
  %161 = vperm.xlu0 %160, %v116
  %v162 = vpop.permute.xlu0 %161
  %v164 = vmul.f32 %v162, %v23
  %v165 = vadd.f32 %v159, %v164
  %166 = vset.pattern.permute.xlu0 54
  %167 = vperm.xlu0 %166, %v116
  %v168 = vpop.permute.xlu0 %167
  %v170 = vmul.f32 %v168, %v24
  %v171 = vadd.f32 %v165, %v170
  %172 = vset.pattern.permute.xlu0 55
  %173 = vperm.xlu0 %172, %v116
  %v174 = vpop.permute.xlu0 %173
  %v176 = vmul.f32 %v174, %v25
  %v177 = vadd.f32 %v171, %v176
  %178 = vset.pattern.permute.xlu0 56
  %179 = vperm.xlu0 %178, %v116
  %v180 = vpop.permute.xlu0 %179
  %v182 = vmul.f32 %v180, %v26
  %v183 = vadd.f32 %v177, %v182
  %184 = vset.pattern.permute.xlu0 57
  %185 = vperm.xlu0 %184, %v116
  %v186 = vpop.permute.xlu0 %185
  %v188 = vmul.f32 %v186, %v27
  %v189 = vadd.f32 %v183, %v188
  %190 = vset.pattern.permute.xlu0 58
  %191 = vperm.xlu0 %190, %v116
  %v192 = vpop.permute.xlu0 %191
  %v194 = vmul.f32 %v192, %v28
  %v195 = vadd.f32 %v189, %v194
  %196 = vset.pattern.permute.xlu0 59
  %197 = vperm.xlu0 %196, %v116
  %v198 = vpop.permute.xlu0 %197
  %v200 = vmul.f32 %v198, %v29
  %v201 = vadd.f32 %v195, %v200
  %202 = vset.pattern.permute.xlu0 60
  %203 = vperm.xlu0 %202, %v116
  %v204 = vpop.permute.xlu0 %203
  %v206 = vmul.f32 %v204, %v30
  %v207 = vadd.f32 %v201, %v206
  %208 = vset.pattern.permute.xlu0 61
  %209 = vperm.xlu0 %208, %v116
  %v210 = vpop.permute.xlu0 %209
  %v212 = vmul.f32 %v210, %v31
  %v213 = vadd.f32 %v207, %v212
  %214 = vset.pattern.permute.xlu0 62
  %215 = vperm.xlu0 %214, %v116
  %v216 = vpop.permute.xlu0 %215
  %v218 = vmul.f32 %v216, %v32
  %v219 = vadd.f32 %v213, %v218
  %220 = vset.pattern.permute.xlu0 63
  %221 = vperm.xlu0 %220, %v116
  %v222 = vpop.permute.xlu0 %221
  %v224 = vmul.f32 %v222, %v33
  %v225 = vadd.f32 %v219, %v224
  %v226 = vxor.u32 %v225, 2147483648
  %v227 = vmul.f32 %v226, 1.442695
  %v228 = vpow.pop %v227
  %v229 = vadd.f32 %v228, 1.0
  %v230 = vrcp.pop %v229
  %v231 = vmul.f32 %v229, %v230
  %v232 = vsub.f32 1.0, %v231
  %v233 = vmul.f32 %v230, %v232
  %v234 = vadd.f32 %v230, %v233
  %vm235 = vweird.f32 %v229
  %vm236 = vweird.f32 %v230
  %vm237 = vmor %vm235, %vm236
  %v238 = vsel %vm237, %v230, %v234
  %v239 = vand.u32 2147483647, %v229
  %vm240 = vcmp.eq.f32.partialorder %v239, 8.507059e+37
  %v241 = vand.u32 %v229, 2147483648
  %v242 = vor.u32 1.1754944e-38, %v241
  %v243 = vsel %vm240, %v242, %v238
  %v244 = vmul.f32 1.0, %v243
  %v245 = vtanh.pop %v225
  %v246 = vmul.f32 %v244, %v110
  %248 = vrot.lane.b32.xlu0 %v245, 96
  %v249 = vpop.permute.xlu0 %248
  %v251 = vmul.f32 %v244, %v249
  %253 = vrot.lane.b32.xlu0 %v251, 16
  %v254 = vpop.permute.xlu0 %253
  %v256 = vadd.f32 %v246, %v254
  %v257 = vtanh.pop %v256
  %259 = vrot.lane.b32.xlu0 %v257, 32
  %v260 = vpop.permute.xlu0 %259
  %v262 = vmul.f32 %v244, %v260
  %263 = vset.pattern.permute.xlu0 4
  %264 = vperm.xlu0 %263, %v11
  %v265 = vpop.permute.xlu0 %264
  %v267 = vmul.f32 %v265, %v16
  %v268 = vadd.f32 %v34, %v267
  %269 = vset.pattern.permute.xlu0 5
  %270 = vperm.xlu0 %269, %v11
  %v271 = vpop.permute.xlu0 %270
  %v273 = vmul.f32 %v271, %v17
  %v274 = vadd.f32 %v268, %v273
  %276 = vset.pattern.permute.xlu0 48
  %277 = vperm.xlu0 %276, %v262
  %v278 = vpop.permute.xlu0 %277
  %v280 = vmul.f32 %v278, %v18
  %v281 = vadd.f32 %v274, %v280
  %282 = vset.pattern.permute.xlu0 49
  %283 = vperm.xlu0 %282, %v262
  %v284 = vpop.permute.xlu0 %283
  %v286 = vmul.f32 %v284, %v19
  %v287 = vadd.f32 %v281, %v286
  %288 = vset.pattern.permute.xlu0 50
  %289 = vperm.xlu0 %288, %v262
  %v290 = vpop.permute.xlu0 %289
  %v292 = vmul.f32 %v290, %v20
  %v293 = vadd.f32 %v287, %v292
  %294 = vset.pattern.permute.xlu0 51
  %295 = vperm.xlu0 %294, %v262
  %v296 = vpop.permute.xlu0 %295
  %v298 = vmul.f32 %v296, %v21
  %v299 = vadd.f32 %v293, %v298
  %300 = vset.pattern.permute.xlu0 52
  %301 = vperm.xlu0 %300, %v262
  %v302 = vpop.permute.xlu0 %301
  %v304 = vmul.f32 %v302, %v22
  %v305 = vadd.f32 %v299, %v304
  %306 = vset.pattern.permute.xlu0 53
  %307 = vperm.xlu0 %306, %v262
  %v308 = vpop.permute.xlu0 %307
  %v310 = vmul.f32 %v308, %v23
  %v311 = vadd.f32 %v305, %v310
  %312 = vset.pattern.permute.xlu0 54
  %313 = vperm.xlu0 %312, %v262
  %v314 = vpop.permute.xlu0 %313
  %v316 = vmul.f32 %v314, %v24
  %v317 = vadd.f32 %v311, %v316
  %318 = vset.pattern.permute.xlu0 55
  %319 = vperm.xlu0 %318, %v262
  %v320 = vpop.permute.xlu0 %319
  %v322 = vmul.f32 %v320, %v25
  %v323 = vadd.f32 %v317, %v322
  %324 = vset.pattern.permute.xlu0 56
  %325 = vperm.xlu0 %324, %v262
  %v326 = vpop.permute.xlu0 %325
  %v328 = vmul.f32 %v326, %v26
  %v329 = vadd.f32 %v323, %v328
  %330 = vset.pattern.permute.xlu0 57
  %331 = vperm.xlu0 %330, %v262
  %v332 = vpop.permute.xlu0 %331
  %v334 = vmul.f32 %v332, %v27
  %v335 = vadd.f32 %v329, %v334
  %336 = vset.pattern.permute.xlu0 58
  %337 = vperm.xlu0 %336, %v262
  %v338 = vpop.permute.xlu0 %337
  %v340 = vmul.f32 %v338, %v28
  %v341 = vadd.f32 %v335, %v340
  %342 = vset.pattern.permute.xlu0 59
  %343 = vperm.xlu0 %342, %v262
  %v344 = vpop.permute.xlu0 %343
  %v346 = vmul.f32 %v344, %v29
  %v347 = vadd.f32 %v341, %v346
  %348 = vset.pattern.permute.xlu0 60
  %349 = vperm.xlu0 %348, %v262
  %v350 = vpop.permute.xlu0 %349
  %v352 = vmul.f32 %v350, %v30
  %v353 = vadd.f32 %v347, %v352
  %354 = vset.pattern.permute.xlu0 61
  %355 = vperm.xlu0 %354, %v262
  %v356 = vpop.permute.xlu0 %355
  %v358 = vmul.f32 %v356, %v31
  %v359 = vadd.f32 %v353, %v358
  %360 = vset.pattern.permute.xlu0 62
  %361 = vperm.xlu0 %360, %v262
  %v362 = vpop.permute.xlu0 %361
  %v364 = vmul.f32 %v362, %v32
  %v365 = vadd.f32 %v359, %v364
  %366 = vset.pattern.permute.xlu0 63
  %367 = vperm.xlu0 %366, %v262
  %v368 = vpop.permute.xlu0 %367
  %v370 = vmul.f32 %v368, %v33
  %v371 = vadd.f32 %v365, %v370
  %v372 = vxor.u32 %v371, 2147483648
  %v373 = vmul.f32 %v372, 1.442695
  %v374 = vpow.pop %v373
  %v375 = vadd.f32 %v374, 1.0
  %v376 = vrcp.pop %v375
  %v377 = vmul.f32 %v375, %v376
  %v378 = vsub.f32 1.0, %v377
  %v379 = vmul.f32 %v376, %v378
  %v380 = vadd.f32 %v376, %v379
  %vm381 = vweird.f32 %v375
  %vm382 = vweird.f32 %v376
  %vm383 = vmor %vm381, %vm382
  %v384 = vsel %vm383, %v376, %v380
  %v385 = vand.u32 2147483647, %v375
  %vm386 = vcmp.eq.f32.partialorder %v385, 8.507059e+37
  %v387 = vand.u32 %v375, 2147483648
  %v388 = vor.u32 1.1754944e-38, %v387
  %v389 = vsel %vm386, %v388, %v384
  %v390 = vmul.f32 1.0, %v389
  %v391 = vtanh.pop %v371
  %v392 = vmul.f32 %v390, %v256
  %394 = vrot.lane.b32.xlu0 %v391, 96
  %v395 = vpop.permute.xlu0 %394
  %v397 = vmul.f32 %v390, %v395
  %399 = vrot.lane.b32.xlu0 %v397, 16
  %v400 = vpop.permute.xlu0 %399
  %v402 = vadd.f32 %v392, %v400
  %v403 = vtanh.pop %v402
  %405 = vrot.lane.b32.xlu0 %v403, 32
  %v406 = vpop.permute.xlu0 %405
  %v408 = vmul.f32 %v390, %v406
  %409 = vset.pattern.permute.xlu0 6
  %410 = vperm.xlu0 %409, %v11
  %v411 = vpop.permute.xlu0 %410
  %v413 = vmul.f32 %v411, %v16
  %v414 = vadd.f32 %v34, %v413
  %415 = vset.pattern.permute.xlu0 7
  %416 = vperm.xlu0 %415, %v11
  %v417 = vpop.permute.xlu0 %416
  %v419 = vmul.f32 %v417, %v17
  %v420 = vadd.f32 %v414, %v419
  %422 = vset.pattern.permute.xlu0 48
  %423 = vperm.xlu0 %422, %v408
  %v424 = vpop.permute.xlu0 %423
  %v426 = vmul.f32 %v424, %v18
  %v427 = vadd.f32 %v420, %v426
  %428 = vset.pattern.permute.xlu0 49
  %429 = vperm.xlu0 %428, %v408
  %v430 = vpop.permute.xlu0 %429
  %v432 = vmul.f32 %v430, %v19
  %v433 = vadd.f32 %v427, %v432
  %434 = vset.pattern.permute.xlu0 50
  %435 = vperm.xlu0 %434, %v408
  %v436 = vpop.permute.xlu0 %435
  %v438 = vmul.f32 %v436, %v20
  %v439 = vadd.f32 %v433, %v438
  %440 = vset.pattern.permute.xlu0 51
  %441 = vperm.xlu0 %440, %v408
  %v442 = vpop.permute.xlu0 %441
  %v444 = vmul.f32 %v442, %v21
  %v445 = vadd.f32 %v439, %v444
  %446 = vset.pattern.permute.xlu0 52
  %447 = vperm.xlu0 %446, %v408
  %v448 = vpop.permute.xlu0 %447
  %v450 = vmul.f32 %v448, %v22
  %v451 = vadd.f32 %v445, %v450
  %452 = vset.pattern.permute.xlu0 53
  %453 = vperm.xlu0 %452, %v408
  %v454 = vpop.permute.xlu0 %453
  %v456 = vmul.f32 %v454, %v23
  %v457 = vadd.f32 %v451, %v456
  %458 = vset.pattern.permute.xlu0 54
  %459 = vperm.xlu0 %458, %v408
  %v460 = vpop.permute.xlu0 %459
  %v462 = vmul.f32 %v460, %v24
  %v463 = vadd.f32 %v457, %v462
  %464 = vset.pattern.permute.xlu0 55
  %465 = vperm.xlu0 %464, %v408
  %v466 = vpop.permute.xlu0 %465
  %v468 = vmul.f32 %v466, %v25
  %v469 = vadd.f32 %v463, %v468
  %470 = vset.pattern.permute.xlu0 56
  %471 = vperm.xlu0 %470, %v408
  %v472 = vpop.permute.xlu0 %471
  %v474 = vmul.f32 %v472, %v26
  %v475 = vadd.f32 %v469, %v474
  %476 = vset.pattern.permute.xlu0 57
  %477 = vperm.xlu0 %476, %v408
  %v478 = vpop.permute.xlu0 %477
  %v480 = vmul.f32 %v478, %v27
  %v481 = vadd.f32 %v475, %v480
  %482 = vset.pattern.permute.xlu0 58
  %483 = vperm.xlu0 %482, %v408
  %v484 = vpop.permute.xlu0 %483
  %v486 = vmul.f32 %v484, %v28
  %v487 = vadd.f32 %v481, %v486
  %488 = vset.pattern.permute.xlu0 59
  %489 = vperm.xlu0 %488, %v408
  %v490 = vpop.permute.xlu0 %489
  %v492 = vmul.f32 %v490, %v29
  %v493 = vadd.f32 %v487, %v492
  %494 = vset.pattern.permute.xlu0 60
  %495 = vperm.xlu0 %494, %v408
  %v496 = vpop.permute.xlu0 %495
  %v498 = vmul.f32 %v496, %v30
  %v499 = vadd.f32 %v493, %v498
  %500 = vset.pattern.permute.xlu0 61
  %501 = vperm.xlu0 %500, %v408
  %v502 = vpop.permute.xlu0 %501
  %v504 = vmul.f32 %v502, %v31
  %v505 = vadd.f32 %v499, %v504
  %506 = vset.pattern.permute.xlu0 62
  %507 = vperm.xlu0 %506, %v408
  %v508 = vpop.permute.xlu0 %507
  %v510 = vmul.f32 %v508, %v32
  %v511 = vadd.f32 %v505, %v510
  %512 = vset.pattern.permute.xlu0 63
  %513 = vperm.xlu0 %512, %v408
  %v514 = vpop.permute.xlu0 %513
  %v516 = vmul.f32 %v514, %v33
  %v517 = vadd.f32 %v511, %v516
  %v518 = vxor.u32 %v517, 2147483648
  %v519 = vmul.f32 %v518, 1.442695
  %v520 = vpow.pop %v519
  %v521 = vadd.f32 %v520, 1.0
  %v522 = vrcp.pop %v521
  %v523 = vmul.f32 %v521, %v522
  %v524 = vsub.f32 1.0, %v523
  %v525 = vmul.f32 %v522, %v524
  %v526 = vadd.f32 %v522, %v525
  %vm527 = vweird.f32 %v521
  %vm528 = vweird.f32 %v522
  %vm529 = vmor %vm527, %vm528
  %v530 = vsel %vm529, %v522, %v526
  %v531 = vand.u32 2147483647, %v521
  %vm532 = vcmp.eq.f32.partialorder %v531, 8.507059e+37
  %v533 = vand.u32 %v521, 2147483648
  %v534 = vor.u32 1.1754944e-38, %v533
  %v535 = vsel %vm532, %v534, %v530
  %v536 = vmul.f32 1.0, %v535
  %v537 = vtanh.pop %v517
  %v538 = vmul.f32 %v536, %v402
  %540 = vrot.lane.b32.xlu0 %v537, 96
  %v541 = vpop.permute.xlu0 %540
  %v543 = vmul.f32 %v536, %v541
  %545 = vrot.lane.b32.xlu0 %v543, 16
  %v546 = vpop.permute.xlu0 %545
  %v548 = vadd.f32 %v538, %v546
  %v549 = vtanh.pop %v548
  %551 = vrot.lane.b32.xlu0 %v549, 32
  %v552 = vpop.permute.xlu0 %551
  %v554 = vmul.f32 %v536, %v552
  %555 = vset.pattern.permute.xlu0 8
  %556 = vperm.xlu0 %555, %v11
  %v557 = vpop.permute.xlu0 %556
  %v559 = vmul.f32 %v557, %v16
  %v560 = vadd.f32 %v34, %v559
  %561 = vset.pattern.permute.xlu0 9
  %562 = vperm.xlu0 %561, %v11
  %v563 = vpop.permute.xlu0 %562
  %v565 = vmul.f32 %v563, %v17
  %v566 = vadd.f32 %v560, %v565
  %568 = vset.pattern.permute.xlu0 48
  %569 = vperm.xlu0 %568, %v554
  %v570 = vpop.permute.xlu0 %569
  %v572 = vmul.f32 %v570, %v18
  %v573 = vadd.f32 %v566, %v572
  %574 = vset.pattern.permute.xlu0 49
  %575 = vperm.xlu0 %574, %v554
  %v576 = vpop.permute.xlu0 %575
  %v578 = vmul.f32 %v576, %v19
  %v579 = vadd.f32 %v573, %v578
  %580 = vset.pattern.permute.xlu0 50
  %581 = vperm.xlu0 %580, %v554
  %v582 = vpop.permute.xlu0 %581
  %v584 = vmul.f32 %v582, %v20
  %v585 = vadd.f32 %v579, %v584
  %586 = vset.pattern.permute.xlu0 51
  %587 = vperm.xlu0 %586, %v554
  %v588 = vpop.permute.xlu0 %587
  %v590 = vmul.f32 %v588, %v21
  %v591 = vadd.f32 %v585, %v590
  %592 = vset.pattern.permute.xlu0 52
  %593 = vperm.xlu0 %592, %v554
  %v594 = vpop.permute.xlu0 %593
  %v596 = vmul.f32 %v594, %v22
  %v597 = vadd.f32 %v591, %v596
  %598 = vset.pattern.permute.xlu0 53
  %599 = vperm.xlu0 %598, %v554
  %v600 = vpop.permute.xlu0 %599
  %v602 = vmul.f32 %v600, %v23
  %v603 = vadd.f32 %v597, %v602
  %604 = vset.pattern.permute.xlu0 54
  %605 = vperm.xlu0 %604, %v554
  %v606 = vpop.permute.xlu0 %605
  %v608 = vmul.f32 %v606, %v24
  %v609 = vadd.f32 %v603, %v608
  %610 = vset.pattern.permute.xlu0 55
  %611 = vperm.xlu0 %610, %v554
  %v612 = vpop.permute.xlu0 %611
  %v614 = vmul.f32 %v612, %v25
  %v615 = vadd.f32 %v609, %v614
  %616 = vset.pattern.permute.xlu0 56
  %617 = vperm.xlu0 %616, %v554
  %v618 = vpop.permute.xlu0 %617
  %v620 = vmul.f32 %v618, %v26
  %v621 = vadd.f32 %v615, %v620
  %622 = vset.pattern.permute.xlu0 57
  %623 = vperm.xlu0 %622, %v554
  %v624 = vpop.permute.xlu0 %623
  %v626 = vmul.f32 %v624, %v27
  %v627 = vadd.f32 %v621, %v626
  %628 = vset.pattern.permute.xlu0 58
  %629 = vperm.xlu0 %628, %v554
  %v630 = vpop.permute.xlu0 %629
  %v632 = vmul.f32 %v630, %v28
  %v633 = vadd.f32 %v627, %v632
  %634 = vset.pattern.permute.xlu0 59
  %635 = vperm.xlu0 %634, %v554
  %v636 = vpop.permute.xlu0 %635
  %v638 = vmul.f32 %v636, %v29
  %v639 = vadd.f32 %v633, %v638
  %640 = vset.pattern.permute.xlu0 60
  %641 = vperm.xlu0 %640, %v554
  %v642 = vpop.permute.xlu0 %641
  %v644 = vmul.f32 %v642, %v30
  %v645 = vadd.f32 %v639, %v644
  %646 = vset.pattern.permute.xlu0 61
  %647 = vperm.xlu0 %646, %v554
  %v648 = vpop.permute.xlu0 %647
  %v650 = vmul.f32 %v648, %v31
  %v651 = vadd.f32 %v645, %v650
  %652 = vset.pattern.permute.xlu0 62
  %653 = vperm.xlu0 %652, %v554
  %v654 = vpop.permute.xlu0 %653
  %v656 = vmul.f32 %v654, %v32
  %v657 = vadd.f32 %v651, %v656
  %658 = vset.pattern.permute.xlu0 63
  %659 = vperm.xlu0 %658, %v554
  %v660 = vpop.permute.xlu0 %659
  %v662 = vmul.f32 %v660, %v33
  %v663 = vadd.f32 %v657, %v662
  %v664 = vxor.u32 %v663, 2147483648
  %v665 = vmul.f32 %v664, 1.442695
  %v666 = vpow.pop %v665
  %v667 = vadd.f32 %v666, 1.0
  %v668 = vrcp.pop %v667
  %v669 = vmul.f32 %v667, %v668
  %v670 = vsub.f32 1.0, %v669
  %v671 = vmul.f32 %v668, %v670
  %v672 = vadd.f32 %v668, %v671
  %vm673 = vweird.f32 %v667
  %vm674 = vweird.f32 %v668
  %vm675 = vmor %vm673, %vm674
  %v676 = vsel %vm675, %v668, %v672
  %v677 = vand.u32 2147483647, %v667
  %vm678 = vcmp.eq.f32.partialorder %v677, 8.507059e+37
  %v679 = vand.u32 %v667, 2147483648
  %v680 = vor.u32 1.1754944e-38, %v679
  %v681 = vsel %vm678, %v680, %v676
  %v682 = vmul.f32 1.0, %v681
  %v683 = vtanh.pop %v663
  %v684 = vmul.f32 %v682, %v548
  %686 = vrot.lane.b32.xlu0 %v683, 96
  %v687 = vpop.permute.xlu0 %686
  %v689 = vmul.f32 %v682, %v687
  %691 = vrot.lane.b32.xlu0 %v689, 16
  %v692 = vpop.permute.xlu0 %691
  %v694 = vadd.f32 %v684, %v692
  %v695 = vtanh.pop %v694
  %697 = vrot.lane.b32.xlu0 %v695, 32
  %v698 = vpop.permute.xlu0 %697
  %v700 = vmul.f32 %v682, %v698
  %701 = vset.pattern.permute.xlu0 10
  %702 = vperm.xlu0 %701, %v11
  %v703 = vpop.permute.xlu0 %702
  %v705 = vmul.f32 %v703, %v16
  %v706 = vadd.f32 %v34, %v705
  %707 = vset.pattern.permute.xlu0 11
  %708 = vperm.xlu0 %707, %v11
  %v709 = vpop.permute.xlu0 %708
  %v711 = vmul.f32 %v709, %v17
  %v712 = vadd.f32 %v706, %v711
  %714 = vset.pattern.permute.xlu0 48
  %715 = vperm.xlu0 %714, %v700
  %v716 = vpop.permute.xlu0 %715
  %v718 = vmul.f32 %v716, %v18
  %v719 = vadd.f32 %v712, %v718
  %720 = vset.pattern.permute.xlu0 49
  %721 = vperm.xlu0 %720, %v700
  %v722 = vpop.permute.xlu0 %721
  %v724 = vmul.f32 %v722, %v19
  %v725 = vadd.f32 %v719, %v724
  %726 = vset.pattern.permute.xlu0 50
  %727 = vperm.xlu0 %726, %v700
  %v728 = vpop.permute.xlu0 %727
  %v730 = vmul.f32 %v728, %v20
  %v731 = vadd.f32 %v725, %v730
  %732 = vset.pattern.permute.xlu0 51
  %733 = vperm.xlu0 %732, %v700
  %v734 = vpop.permute.xlu0 %733
  %v736 = vmul.f32 %v734, %v21
  %v737 = vadd.f32 %v731, %v736
  %738 = vset.pattern.permute.xlu0 52
  %739 = vperm.xlu0 %738, %v700
  %v740 = vpop.permute.xlu0 %739
  %v742 = vmul.f32 %v740, %v22
  %v743 = vadd.f32 %v737, %v742
  %744 = vset.pattern.permute.xlu0 53
  %745 = vperm.xlu0 %744, %v700
  %v746 = vpop.permute.xlu0 %745
  %v748 = vmul.f32 %v746, %v23
  %v749 = vadd.f32 %v743, %v748
  %750 = vset.pattern.permute.xlu0 54
  %751 = vperm.xlu0 %750, %v700
  %v752 = vpop.permute.xlu0 %751
  %v754 = vmul.f32 %v752, %v24
  %v755 = vadd.f32 %v749, %v754
  %756 = vset.pattern.permute.xlu0 55
  %757 = vperm.xlu0 %756, %v700
  %v758 = vpop.permute.xlu0 %757
  %v760 = vmul.f32 %v758, %v25
  %v761 = vadd.f32 %v755, %v760
  %762 = vset.pattern.permute.xlu0 56
  %763 = vperm.xlu0 %762, %v700
  %v764 = vpop.permute.xlu0 %763
  %v766 = vmul.f32 %v764, %v26
  %v767 = vadd.f32 %v761, %v766
  %768 = vset.pattern.permute.xlu0 57
  %769 = vperm.xlu0 %768, %v700
  %v770 = vpop.permute.xlu0 %769
  %v772 = vmul.f32 %v770, %v27
  %v773 = vadd.f32 %v767, %v772
  %774 = vset.pattern.permute.xlu0 58
  %775 = vperm.xlu0 %774, %v700
  %v776 = vpop.permute.xlu0 %775
  %v778 = vmul.f32 %v776, %v28
  %v779 = vadd.f32 %v773, %v778
  %780 = vset.pattern.permute.xlu0 59
  %781 = vperm.xlu0 %780, %v700
  %v782 = vpop.permute.xlu0 %781
  %v784 = vmul.f32 %v782, %v29
  %v785 = vadd.f32 %v779, %v784
  %786 = vset.pattern.permute.xlu0 60
  %787 = vperm.xlu0 %786, %v700
  %v788 = vpop.permute.xlu0 %787
  %v790 = vmul.f32 %v788, %v30
  %v791 = vadd.f32 %v785, %v790
  %792 = vset.pattern.permute.xlu0 61
  %793 = vperm.xlu0 %792, %v700
  %v794 = vpop.permute.xlu0 %793
  %v796 = vmul.f32 %v794, %v31
  %v797 = vadd.f32 %v791, %v796
  %798 = vset.pattern.permute.xlu0 62
  %799 = vperm.xlu0 %798, %v700
  %v800 = vpop.permute.xlu0 %799
  %v802 = vmul.f32 %v800, %v32
  %v803 = vadd.f32 %v797, %v802
  %804 = vset.pattern.permute.xlu0 63
  %805 = vperm.xlu0 %804, %v700
  %v806 = vpop.permute.xlu0 %805
  %v808 = vmul.f32 %v806, %v33
  %v809 = vadd.f32 %v803, %v808
  %v810 = vxor.u32 %v809, 2147483648
  %v811 = vmul.f32 %v810, 1.442695
  %v812 = vpow.pop %v811
  %v813 = vadd.f32 %v812, 1.0
  %v814 = vrcp.pop %v813
  %v815 = vmul.f32 %v813, %v814
  %v816 = vsub.f32 1.0, %v815
  %v817 = vmul.f32 %v814, %v816
  %v818 = vadd.f32 %v814, %v817
  %vm819 = vweird.f32 %v813
  %vm820 = vweird.f32 %v814
  %vm821 = vmor %vm819, %vm820
  %v822 = vsel %vm821, %v814, %v818
  %v823 = vand.u32 2147483647, %v813
  %vm824 = vcmp.eq.f32.partialorder %v823, 8.507059e+37
  %v825 = vand.u32 %v813, 2147483648
  %v826 = vor.u32 1.1754944e-38, %v825
  %v827 = vsel %vm824, %v826, %v822
  %v828 = vmul.f32 1.0, %v827
  %v829 = vtanh.pop %v809
  %v830 = vmul.f32 %v828, %v694
  %832 = vrot.lane.b32.xlu0 %v829, 96
  %v833 = vpop.permute.xlu0 %832
  %v835 = vmul.f32 %v828, %v833
  %837 = vrot.lane.b32.xlu0 %v835, 16
  %v838 = vpop.permute.xlu0 %837
  %v840 = vadd.f32 %v830, %v838
  %v841 = vtanh.pop %v840
  %843 = vrot.lane.b32.xlu0 %v841, 32
  %v844 = vpop.permute.xlu0 %843
  %v846 = vmul.f32 %v828, %v844
  %847 = vset.pattern.permute.xlu0 12
  %848 = vperm.xlu0 %847, %v11
  %v849 = vpop.permute.xlu0 %848
  %v851 = vmul.f32 %v849, %v16
  %v852 = vadd.f32 %v34, %v851
  %853 = vset.pattern.permute.xlu0 13
  %854 = vperm.xlu0 %853, %v11
  %v855 = vpop.permute.xlu0 %854
  %v857 = vmul.f32 %v855, %v17
  %v858 = vadd.f32 %v852, %v857
  %860 = vset.pattern.permute.xlu0 48
  %861 = vperm.xlu0 %860, %v846
  %v862 = vpop.permute.xlu0 %861
  %v864 = vmul.f32 %v862, %v18
  %v865 = vadd.f32 %v858, %v864
  %866 = vset.pattern.permute.xlu0 49
  %867 = vperm.xlu0 %866, %v846
  %v868 = vpop.permute.xlu0 %867
  %v870 = vmul.f32 %v868, %v19
  %v871 = vadd.f32 %v865, %v870
  %872 = vset.pattern.permute.xlu0 50
  %873 = vperm.xlu0 %872, %v846
  %v874 = vpop.permute.xlu0 %873
  %v876 = vmul.f32 %v874, %v20
  %v877 = vadd.f32 %v871, %v876
  %878 = vset.pattern.permute.xlu0 51
  %879 = vperm.xlu0 %878, %v846
  %v880 = vpop.permute.xlu0 %879
  %v882 = vmul.f32 %v880, %v21
  %v883 = vadd.f32 %v877, %v882
  %884 = vset.pattern.permute.xlu0 52
  %885 = vperm.xlu0 %884, %v846
  %v886 = vpop.permute.xlu0 %885
  %v888 = vmul.f32 %v886, %v22
  %v889 = vadd.f32 %v883, %v888
  %890 = vset.pattern.permute.xlu0 53
  %891 = vperm.xlu0 %890, %v846
  %v892 = vpop.permute.xlu0 %891
  %v894 = vmul.f32 %v892, %v23
  %v895 = vadd.f32 %v889, %v894
  %896 = vset.pattern.permute.xlu0 54
  %897 = vperm.xlu0 %896, %v846
  %v898 = vpop.permute.xlu0 %897
  %v900 = vmul.f32 %v898, %v24
  %v901 = vadd.f32 %v895, %v900
  %902 = vset.pattern.permute.xlu0 55
  %903 = vperm.xlu0 %902, %v846
  %v904 = vpop.permute.xlu0 %903
  %v906 = vmul.f32 %v904, %v25
  %v907 = vadd.f32 %v901, %v906
  %908 = vset.pattern.permute.xlu0 56
  %909 = vperm.xlu0 %908, %v846
  %v910 = vpop.permute.xlu0 %909
  %v912 = vmul.f32 %v910, %v26
  %v913 = vadd.f32 %v907, %v912
  %914 = vset.pattern.permute.xlu0 57
  %915 = vperm.xlu0 %914, %v846
  %v916 = vpop.permute.xlu0 %915
  %v918 = vmul.f32 %v916, %v27
  %v919 = vadd.f32 %v913, %v918
  %920 = vset.pattern.permute.xlu0 58
  %921 = vperm.xlu0 %920, %v846
  %v922 = vpop.permute.xlu0 %921
  %v924 = vmul.f32 %v922, %v28
  %v925 = vadd.f32 %v919, %v924
  %926 = vset.pattern.permute.xlu0 59
  %927 = vperm.xlu0 %926, %v846
  %v928 = vpop.permute.xlu0 %927
  %v930 = vmul.f32 %v928, %v29
  %v931 = vadd.f32 %v925, %v930
  %932 = vset.pattern.permute.xlu0 60
  %933 = vperm.xlu0 %932, %v846
  %v934 = vpop.permute.xlu0 %933
  %v936 = vmul.f32 %v934, %v30
  %v937 = vadd.f32 %v931, %v936
  %938 = vset.pattern.permute.xlu0 61
  %939 = vperm.xlu0 %938, %v846
  %v940 = vpop.permute.xlu0 %939
  %v942 = vmul.f32 %v940, %v31
  %v943 = vadd.f32 %v937, %v942
  %944 = vset.pattern.permute.xlu0 62
  %945 = vperm.xlu0 %944, %v846
  %v946 = vpop.permute.xlu0 %945
  %v948 = vmul.f32 %v946, %v32
  %v949 = vadd.f32 %v943, %v948
  %950 = vset.pattern.permute.xlu0 63
  %951 = vperm.xlu0 %950, %v846
  %v952 = vpop.permute.xlu0 %951
  %v954 = vmul.f32 %v952, %v33
  %v955 = vadd.f32 %v949, %v954
  %v956 = vxor.u32 %v955, 2147483648
  %v957 = vmul.f32 %v956, 1.442695
  %v958 = vpow.pop %v957
  %v959 = vadd.f32 %v958, 1.0
  %v960 = vrcp.pop %v959
  %v961 = vmul.f32 %v959, %v960
  %v962 = vsub.f32 1.0, %v961
  %v963 = vmul.f32 %v960, %v962
  %v964 = vadd.f32 %v960, %v963
  %vm965 = vweird.f32 %v959
  %vm966 = vweird.f32 %v960
  %vm967 = vmor %vm965, %vm966
  %v968 = vsel %vm967, %v960, %v964
  %v969 = vand.u32 2147483647, %v959
  %vm970 = vcmp.eq.f32.partialorder %v969, 8.507059e+37
  %v971 = vand.u32 %v959, 2147483648
  %v972 = vor.u32 1.1754944e-38, %v971
  %v973 = vsel %vm970, %v972, %v968
  %v974 = vmul.f32 1.0, %v973
  %v975 = vtanh.pop %v955
  %v976 = vmul.f32 %v974, %v840
  %978 = vrot.lane.b32.xlu0 %v975, 96
  %v979 = vpop.permute.xlu0 %978
  %v981 = vmul.f32 %v974, %v979
  %983 = vrot.lane.b32.xlu0 %v981, 16
  %v984 = vpop.permute.xlu0 %983
  %v986 = vadd.f32 %v976, %v984
  %v987 = vtanh.pop %v986
  %989 = vrot.lane.b32.xlu0 %v987, 32
  %v990 = vpop.permute.xlu0 %989
  %v992 = vmul.f32 %v974, %v990
  %993 = vset.pattern.permute.xlu0 14
  %994 = vperm.xlu0 %993, %v11
  %v995 = vpop.permute.xlu0 %994
  %v997 = vmul.f32 %v995, %v16
  %v998 = vadd.f32 %v34, %v997
  %999 = vset.pattern.permute.xlu0 15
  %1000 = vperm.xlu0 %999, %v11
  %v1001 = vpop.permute.xlu0 %1000
  %v1003 = vmul.f32 %v1001, %v17
  %v1004 = vadd.f32 %v998, %v1003
  %1006 = vset.pattern.permute.xlu0 48
  %1007 = vperm.xlu0 %1006, %v992
  %v1008 = vpop.permute.xlu0 %1007
  %v1010 = vmul.f32 %v1008, %v18
  %v1011 = vadd.f32 %v1004, %v1010
  %1012 = vset.pattern.permute.xlu0 49
  %1013 = vperm.xlu0 %1012, %v992
  %v1014 = vpop.permute.xlu0 %1013
  %v1016 = vmul.f32 %v1014, %v19
  %v1017 = vadd.f32 %v1011, %v1016
  %1018 = vset.pattern.permute.xlu0 50
  %1019 = vperm.xlu0 %1018, %v992
  %v1020 = vpop.permute.xlu0 %1019
  %v1022 = vmul.f32 %v1020, %v20
  %v1023 = vadd.f32 %v1017, %v1022
  %1024 = vset.pattern.permute.xlu0 51
  %1025 = vperm.xlu0 %1024, %v992
  %v1026 = vpop.permute.xlu0 %1025
  %v1028 = vmul.f32 %v1026, %v21
  %v1029 = vadd.f32 %v1023, %v1028
  %1030 = vset.pattern.permute.xlu0 52
  %1031 = vperm.xlu0 %1030, %v992
  %v1032 = vpop.permute.xlu0 %1031
  %v1034 = vmul.f32 %v1032, %v22
  %v1035 = vadd.f32 %v1029, %v1034
  %1036 = vset.pattern.permute.xlu0 53
  %1037 = vperm.xlu0 %1036, %v992
  %v1038 = vpop.permute.xlu0 %1037
  %v1040 = vmul.f32 %v1038, %v23
  %v1041 = vadd.f32 %v1035, %v1040
  %1042 = vset.pattern.permute.xlu0 54
  %1043 = vperm.xlu0 %1042, %v992
  %v1044 = vpop.permute.xlu0 %1043
  %v1046 = vmul.f32 %v1044, %v24
  %v1047 = vadd.f32 %v1041, %v1046
  %1048 = vset.pattern.permute.xlu0 55
  %1049 = vperm.xlu0 %1048, %v992
  %v1050 = vpop.permute.xlu0 %1049
  %v1052 = vmul.f32 %v1050, %v25
  %v1053 = vadd.f32 %v1047, %v1052
  %1054 = vset.pattern.permute.xlu0 56
  %1055 = vperm.xlu0 %1054, %v992
  %v1056 = vpop.permute.xlu0 %1055
  %v1058 = vmul.f32 %v1056, %v26
  %v1059 = vadd.f32 %v1053, %v1058
  %1060 = vset.pattern.permute.xlu0 57
  %1061 = vperm.xlu0 %1060, %v992
  %v1062 = vpop.permute.xlu0 %1061
  %v1064 = vmul.f32 %v1062, %v27
  %v1065 = vadd.f32 %v1059, %v1064
  %1066 = vset.pattern.permute.xlu0 58
  %1067 = vperm.xlu0 %1066, %v992
  %v1068 = vpop.permute.xlu0 %1067
  %v1070 = vmul.f32 %v1068, %v28
  %v1071 = vadd.f32 %v1065, %v1070
  %1072 = vset.pattern.permute.xlu0 59
  %1073 = vperm.xlu0 %1072, %v992
  %v1074 = vpop.permute.xlu0 %1073
  %v1076 = vmul.f32 %v1074, %v29
  %v1077 = vadd.f32 %v1071, %v1076
  %1078 = vset.pattern.permute.xlu0 60
  %1079 = vperm.xlu0 %1078, %v992
  %v1080 = vpop.permute.xlu0 %1079
  %v1082 = vmul.f32 %v1080, %v30
  %v1083 = vadd.f32 %v1077, %v1082
  %1084 = vset.pattern.permute.xlu0 61
  %1085 = vperm.xlu0 %1084, %v992
  %v1086 = vpop.permute.xlu0 %1085
  %v1088 = vmul.f32 %v1086, %v31
  %v1089 = vadd.f32 %v1083, %v1088
  %1090 = vset.pattern.permute.xlu0 62
  %1091 = vperm.xlu0 %1090, %v992
  %v1092 = vpop.permute.xlu0 %1091
  %v1094 = vmul.f32 %v1092, %v32
  %v1095 = vadd.f32 %v1089, %v1094
  %1096 = vset.pattern.permute.xlu0 63
  %1097 = vperm.xlu0 %1096, %v992
  %v1098 = vpop.permute.xlu0 %1097
  %v1100 = vmul.f32 %v1098, %v33
  %v1101 = vadd.f32 %v1095, %v1100
  %v1102 = vxor.u32 %v1101, 2147483648
  %v1103 = vmul.f32 %v1102, 1.442695
  %v1104 = vpow.pop %v1103
  %v1105 = vadd.f32 %v1104, 1.0
  %v1106 = vrcp.pop %v1105
  %v1107 = vmul.f32 %v1105, %v1106
  %v1108 = vsub.f32 1.0, %v1107
  %v1109 = vmul.f32 %v1106, %v1108
  %v1110 = vadd.f32 %v1106, %v1109
  %vm1111 = vweird.f32 %v1105
  %vm1112 = vweird.f32 %v1106
  %vm1113 = vmor %vm1111, %vm1112
  %v1114 = vsel %vm1113, %v1106, %v1110
  %v1115 = vand.u32 2147483647, %v1105
  %vm1116 = vcmp.eq.f32.partialorder %v1115, 8.507059e+37
  %v1117 = vand.u32 %v1105, 2147483648
  %v1118 = vor.u32 1.1754944e-38, %v1117
  %v1119 = vsel %vm1116, %v1118, %v1114
  %v1120 = vmul.f32 1.0, %v1119
  %v1121 = vtanh.pop %v1101
  %v1122 = vmul.f32 %v1120, %v986
  %1124 = vrot.lane.b32.xlu0 %v1121, 96
  %v1125 = vpop.permute.xlu0 %1124
  %v1127 = vmul.f32 %v1120, %v1125
  %1129 = vrot.lane.b32.xlu0 %v1127, 16
  %v1130 = vpop.permute.xlu0 %1129
  %v1132 = vadd.f32 %v1122, %v1130
  %v1133 = vtanh.pop %v1132
  %1135 = vrot.lane.b32.xlu0 %v1133, 32
  %v1136 = vpop.permute.xlu0 %1135
  %v1138 = vmul.f32 %v1120, %v1136
  %v1139 = vld [vmem:[%s1 + $0x20] sm:$0xff]
  %v1140 = vld [vmem:[%s1 + $0x28] sm:$0xff]
  %v1141 = vld [vmem:[%s1 + $0x30] sm:$0x1]
  %v1142 = vperm.slane %v1141, 0
  %1144 = vrot.lane.b32.xlu0 %v1138, 80
  %v1145 = vpop.permute.xlu0 %1144
  %vm1146 = vcmask 130048
  %v1147 = vsel %vm1146, %v1145, 0
  %1149 = vmatpush.msra.mxu0 0.0
  %1150 = vmatpush.msra.mxu0 0.0
  %1151 = vmatpush.msra.mxu0 0.0
  %1152 = vmatpush.msra.mxu0 0.0
  %1153 = vmatpush.msra.mxu0 0.0
  %1154 = vmatpush.msra.mxu0 0.0
  %1155 = vmatpush.msra.mxu0 0.0
  %1156 = vmatpush.msra.mxu0 0.0
  %1157 = vmatpush.msra.mxu0 0.0
  %1158 = vmatpush.msra.mxu0 0.0
  %1159 = vmatpush.msra.mxu0 0.0
  %1160 = vmatpush.msra.mxu0 0.0
  %1161 = vmatpush.msra.mxu0 0.0
  %1162 = vmatpush.msra.mxu0 0.0
  %1163 = vmatpush.msra.mxu0 %v1140
  %1164 = vmatpush.msra.mxu0 %v1139
  %1165 = vmatmul.f32.gmra.mxu0 %v1147
  %v1166 = vpop.f32.mrf.mxu0
  %v1167 = vadd.f32 %v1142, %v1166
  %1168 = vdwg.mxu0
  %v1169 = vmax.f32 %v1167, 0.0
  %v1170 = vld [vmem:[%s1 + $0x38] sm:$0xff]
  %v1171 = vld [vmem:[%s1 + $0x40] sm:$0xff]
  %v1172 = vld [vmem:[%s1 + $0x48] sm:$0x1]
  %v1173 = vperm.slane %v1172, 0
  %v1175 = vsel %vm1146, %v1169, 0
  %1177 = vmatpush.msra.mxu0 0.0
  %1178 = vmatpush.msra.mxu0 0.0
  %1179 = vmatpush.msra.mxu0 0.0
  %1180 = vmatpush.msra.mxu0 0.0
  %1181 = vmatpush.msra.mxu0 0.0
  %1182 = vmatpush.msra.mxu0 0.0
  %1183 = vmatpush.msra.mxu0 0.0
  %1184 = vmatpush.msra.mxu0 0.0
  %1185 = vmatpush.msra.mxu0 0.0
  %1186 = vmatpush.msra.mxu0 0.0
  %1187 = vmatpush.msra.mxu0 0.0
  %1188 = vmatpush.msra.mxu0 0.0
  %1189 = vmatpush.msra.mxu0 0.0
  %1190 = vmatpush.msra.mxu0 0.0
  %1191 = vmatpush.msra.mxu0 %v1171
  %1192 = vmatpush.msra.mxu0 %v1170
  %1193 = vmatmul.f32.gmra.mxu0 %v1175
  %v1194 = vpop.f32.mrf.mxu0
  %v1195 = vadd.f32 %v1173, %v1194
  %1196 = vdwg.mxu0
  %vm1197 = vcmask 15360
  %v1198 = vsel %vm1197, %v1195, -inf
  %1199 = vmax.xlane.f32.xlu0 %v1198
  %v1200 = vpop.xlane.xlu0 %1199
  %v1201 = vsub.f32 %v1195, %v1200
  %v1202 = vmul.f32 %v1201, 1.442695
  %v1203 = vpow.pop %v1202
  %v1204 = vsel %vm1197, %v1203, 0.0
  %1205 = vadd.xlane.f32.xlu0 %v1204
  %v1206 = vpop.xlane.xlu0 %1205
  %v1207 = vrcp.pop %v1206
  %v1208 = vmul.f32 %v1203, %v1207
  %1209 = vst.msk [vmem:[%s2] sm:$0xff] %vm1197, %v1208
  // Predicated region
  $region10: #{policy_forward.1} parent=0 // pred_check
    _
  $region11: #{policy_forward.1} parent=0 // pred_check_branch
    %1211 = sbr.rel (0) target = $region13
  $region12: #{policy_forward.1} parent=0 // pred_region
    _
  $region13: #{policy_forward.1} parent=0 // pred_fallthru
    _
  // Predicated region
  $region14: #{policy_forward.1} parent=0 // pred_check
    _
  $region15: #{policy_forward.1} parent=0 // pred_check_branch
    %1213 = sbr.rel (0) target = $region17
  $region16: #{policy_forward.1} parent=0 // pred_region
    _
  $region17: #{policy_forward.1} parent=0 // pred_fallthru
    _

</llo_original>
